<compile_context>
chip_gen: v5e
topology: v5e:2x2
jax: 0.10.0
libtpu: 0.0.40
codegen_flags: <defaults>
</compile_context>

<pallas_src>
import functools

import jax
import jax.numpy as jnp
from jax.experimental import pallas as pl
from jax.experimental.pallas import tpu as pltpu

LANE = 128
SUBLANE = 8  # f32 sublane granule


def _round_up(x, m):
    return ((x + m - 1) // m) * m


# ---------------------------------------------------------------------------
# Kernel: the whole encoder (all GAT layers) in one Pallas call.
# ---------------------------------------------------------------------------
def _encoder_kernel(x_ref, neg_ref, *refs, layer_cfgs, has_fold):
    out_ref = refs[-1]
    if has_fold:
        fold_ref = refs[-2]
        param_refs = refs[:-2]
    else:
        fold_ref = None
        param_refs = refs[:-1]

    neg = neg_ref[...]                 # [Np, Np] f32: 0 on edges, -1e30 off
    x = x_ref[...]                     # [Np, F0] f32

    for l, cfg in enumerate(layer_cfgs):
        w = param_refs[5 * l + 0][...]        # [Fin_pad, D]
        a_srcT = param_refs[5 * l + 1][...]   # [H, D]
        a_dst = param_refs[5 * l + 2][...]    # [D, H]
        bias = param_refs[5 * l + 3][...]     # [1, out_cols]
        hmask = param_refs[5 * l + 4][...]    # [H, D] 0/1 lane mask per head
        heads = cfg["heads"]

        # Linear transform (MXU): all heads packed into one lane block.
        xw = jnp.dot(x, w, preferred_element_type=jnp.float32)          # [Np, D]

        # Batched attention logits (all heads at once):
        #   dst[i, h]  = <xw_h[i], att_dst_h>
        #   srcT[h, j] = <xw_h[j], att_src_h>
        # After head packing, any relayout of xw here is at most [Np, 128].
        dst = jnp.dot(xw, a_dst, preferred_element_type=jnp.float32)    # [Np, H]
        srcT = jax.lax.dot_general(
            a_srcT, xw, (((1,), (1,)), ((), ())),
            preferred_element_type=jnp.float32)                         # [H, Np]

        acc = None
        for h in range(heads):
            # e[i, j] = leaky_relu(alpha_dst[i] + alpha_src[j], 0.2) + neg[i, j]
            z = dst[:, h:h + 1] + srcT[h:h + 1, :]                      # [Np, Np]
            z = jnp.maximum(z, 0.2 * z)
            e = z + neg
            e = e - jnp.max(e, axis=-1, keepdims=True)
            p = jnp.exp(e)            # non-edges underflow to exact 0 (self-loops
            #                           guarantee a finite row max)
            denom = jnp.sum(p, axis=-1, keepdims=True)
            attn = p * pl.reciprocal(denom, approx=True)                # [Np, Np]

            # Aggregate, then keep only head h's lanes of the packed block:
            #   (attn_h @ (xw * mask_h)) == (attn_h @ xw) * mask_h
            agg = jnp.dot(attn, xw, preferred_element_type=jnp.float32)  # [Np, D]
            contrib = agg * hmask[h:h + 1, :]
            acc = contrib if acc is None else acc + contrib

        if not cfg["concat"]:
            # Mean over heads: fold maps lane (h*C + c) -> c with weight 1/H.
            acc = jnp.dot(acc, fold_ref[...],
                          preferred_element_type=jnp.float32)           # [Np, Opad]

        out = acc + bias
        if cfg["apply_elu"]:
            out = jnp.where(out > 0, out, jnp.exp(jnp.minimum(out, 0.0)) - 1.0)
        x = out

    out_ref[...] = x.astype(out_ref.dtype)


# ---------------------------------------------------------------------------
# Parameter construction (matches the PyTorch module's shapes) and packing
# into the head-packed, lane-padded layout the kernel expects.
# ---------------------------------------------------------------------------
def init_gat_params(key, in_dim, out_ch, heads, concat):
    k_w, k_s, k_d = jax.random.split(key, 3)

    def glorot(k, shape):
        fan_in, fan_out = shape[-2], shape[-1]
        scale = jnp.sqrt(6.0 / (fan_in + fan_out))
        return jax.random.uniform(k, shape, jnp.float32, -scale, scale)

    w = glorot(k_w, (in_dim, heads * out_ch))
    att_src = glorot(k_s, (heads, out_ch))
    att_dst = glorot(k_d, (heads, out_ch))
    bias_dim = heads * out_ch if concat else out_ch
    bias = jnp.zeros((1, bias_dim), jnp.float32)
    return (w, att_src, att_dst, bias)


def build_encoder_params(key, input_dim, hidden_dims, output_dim, attn_heads):
    dims = [input_dim] + list(hidden_dims)
    params, cfgs = [], []
    keys = jax.random.split(key, len(dims))
    for i in range(len(dims) - 1):
        out_ch = dims[i + 1] // attn_heads
        params.append(init_gat_params(keys[i], dims[i], out_ch, attn_heads, True))
        cfgs.append(dict(heads=attn_heads, out_ch=out_ch, concat=True,
                         in_dim=dims[i]))
    params.append(init_gat_params(keys[-1], dims[-1], output_dim, attn_heads, False))
    cfgs.append(dict(heads=attn_heads, out_ch=output_dim, concat=False,
                     in_dim=dims[-1]))
    return params, cfgs


def _pack_layer(params, cfg, in_dim_pad):
    """Pack one layer's params: all heads share one (padded) lane block."""
    w, att_src, att_dst, bias = params
    heads, c, f_in = cfg["heads"], cfg["out_ch"], cfg["in_dim"]
    d = _round_up(heads * c, LANE)

    # Weight: natural concat order (head h at lanes [h*c, (h+1)*c)); zero-pad
    # extra input rows (they multiply zero-padded input lanes) and output lanes.
    w_p = jnp.zeros((in_dim_pad, d), jnp.float32).at[:f_in, :heads * c].set(w)

    a_dst = jnp.zeros((d, heads), jnp.float32)
    a_srcT = jnp.zeros((heads, d), jnp.float32)
    hmask = jnp.zeros((heads, d), jnp.float32)
    for h in range(heads):
        a_dst = a_dst.at[h * c:(h + 1) * c, h].set(att_dst[h])
        a_srcT = a_srcT.at[h, h * c:(h + 1) * c].set(att_src[h])
        hmask = hmask.at[h, h * c:(h + 1) * c].set(1.0)

    if cfg["concat"]:
        b = jnp.zeros((1, d), jnp.float32).at[0, :heads * c].set(bias.reshape(-1))
    else:
        out_pad = _round_up(c, LANE)
        b = jnp.zeros((1, out_pad), jnp.float32).at[0, :c].set(bias.reshape(-1))

    return [w_p, a_srcT, a_dst, b, hmask]


# ---------------------------------------------------------------------------
# Encoder forward: one fused pallas_call.
# ---------------------------------------------------------------------------
def encoder_forward(x, adj, layer_params, layer_cfgs):
    n, f0 = x.shape
    # Small graphs: pad the node axis only to the sublane granule (8 for f32).
    n_pad = _round_up(n, SUBLANE) if n < LANE else _round_up(n, LANE)

    x_pad = jnp.zeros((n_pad, f0), jnp.float32).at[:n, :].set(x)

    # Additive mask computed once, outside the kernel.  Padded nodes get a
    # self-loop so their softmax rows are well defined; they never influence
    # real rows (adj[real, padded] = 0).
    adj_pad = jnp.zeros((n_pad, n_pad), jnp.float32).at[:n, :n].set(adj)
    adj_pad = jnp.maximum(adj_pad, jnp.eye(n_pad, dtype=jnp.float32))
    neg = jnp.where(adj_pad > 0, 0.0, -1e30).astype(jnp.float32)

    packed, kernel_cfgs = [], []
    n_layers = len(layer_params)
    in_dim_pad = f0
    for i, (p, cfg) in enumerate(zip(layer_params, layer_cfgs)):
        packed.extend(_pack_layer(p, cfg, in_dim_pad))
        d = _round_up(cfg["heads"] * cfg["out_ch"], LANE)
        kernel_cfgs.append(dict(heads=cfg["heads"], concat=cfg["concat"],
                                apply_elu=(i != n_layers - 1)))
        in_dim_pad = d if cfg["concat"] else _round_up(cfg["out_ch"], LANE)

    last = layer_cfgs[-1]
    has_fold = not last["concat"]
    if has_fold:
        c, heads = last["out_ch"], last["heads"]
        d_last = _round_up(heads * c, LANE)
        out_pad_cols = _round_up(c, LANE)
        fold = jnp.zeros((d_last, out_pad_cols), jnp.float32)
        for h in range(heads):
            fold = fold.at[h * c:(h + 1) * c, :c].set(
                jnp.eye(c, dtype=jnp.float32) / heads)
        packed.append(fold)
        out_cols = c
    else:
        out_pad_cols = _round_up(last["heads"] * last["out_ch"], LANE)
        out_cols = last["heads"] * last["out_ch"]

    kernel = functools.partial(_encoder_kernel,
                               layer_cfgs=tuple(kernel_cfgs),
                               has_fold=has_fold)
    vmem = pl.BlockSpec(memory_space=pltpu.MemorySpace.VMEM)

    out_pad = pl.pallas_call(
        kernel,
        out_shape=jax.ShapeDtypeStruct((n_pad, out_pad_cols), jnp.float32),
        in_specs=[vmem] * (2 + len(packed)),
        out_specs=vmem,
        compiler_params=pltpu.CompilerParams(vmem_limit_bytes=32 << 20),
    )(x_pad, neg, *packed)

    return out_pad[:n, :out_cols]


def edge_index_to_adj(edge_index, num_nodes):
    # adj[i, j] = 1 iff edge (src=j, dst=i) exists; add self loops (PyG default).
    src, dst = edge_index[0], edge_index[1]
    adj = jnp.zeros((num_nodes, num_nodes), jnp.float32).at[dst, src].set(1.0)
    adj = jnp.maximum(adj, jnp.eye(num_nodes, dtype=jnp.float32))
    return adj


if __name__ == "__main__":
    key = jax.random.PRNGKey(0)
    k_x, k_p = jax.random.split(key)

    # Small, module-consistent shapes.
    num_nodes = 16
    input_dim = 32
    hidden_dims = [64, 32]
    output_dim = 16
    attn_heads = 4

    x = jax.random.normal(k_x, (num_nodes, input_dim), jnp.float32)

    # Deterministic bidirectional ring graph: edge_index has shape [2, 2*N].
    idx = jnp.arange(num_nodes)
    edge_src = jnp.concatenate([idx, (idx + 1) % num_nodes])
    edge_dst = jnp.concatenate([(idx + 1) % num_nodes, idx])
    edge_index = jnp.stack([edge_src, edge_dst])            # [2, 32]
    adj = edge_index_to_adj(edge_index, num_nodes)

    layer_params, layer_cfgs = build_encoder_params(
        k_p, input_dim, hidden_dims, output_dim, attn_heads)

    out = encoder_forward(x, adj, layer_params, layer_cfgs)
    jax.block_until_ready(out)
    assert out.shape == (num_nodes, output_dim), out.shape
    print("KERNEL_OK")
</pallas_src>

<mosaic_0001>
module attributes {stable_mosaic.version = 11 : i64} {
  func.func @_encoder_kernel(%arg0: memref<16x32xf32, #tpu.memory_space<vmem>>, %arg1: memref<16x16xf32, #tpu.memory_space<vmem>>, %arg2: memref<32x128xf32, #tpu.memory_space<vmem>>, %arg3: memref<4x128xf32, #tpu.memory_space<vmem>>, %arg4: memref<128x4xf32, #tpu.memory_space<vmem>>, %arg5: memref<1x128xf32, #tpu.memory_space<vmem>>, %arg6: memref<4x128xf32, #tpu.memory_space<vmem>>, %arg7: memref<128x128xf32, #tpu.memory_space<vmem>>, %arg8: memref<4x128xf32, #tpu.memory_space<vmem>>, %arg9: memref<128x4xf32, #tpu.memory_space<vmem>>, %arg10: memref<1x128xf32, #tpu.memory_space<vmem>>, %arg11: memref<4x128xf32, #tpu.memory_space<vmem>>, %arg12: memref<128x128xf32, #tpu.memory_space<vmem>>, %arg13: memref<4x128xf32, #tpu.memory_space<vmem>>, %arg14: memref<128x4xf32, #tpu.memory_space<vmem>>, %arg15: memref<1x128xf32, #tpu.memory_space<vmem>>, %arg16: memref<4x128xf32, #tpu.memory_space<vmem>>, %arg17: memref<128x128xf32, #tpu.memory_space<vmem>>, %arg18: memref<16x128xf32, #tpu.memory_space<vmem>>) attributes {dimension_semantics = [], scalar_prefetch = 0 : i64, scratch_operands = 0 : i64, tpu.core_type = #tpu.core_type<tc>} {
    %c0 = arith.constant 0 : index
    %c0_0 = arith.constant 0 : index
    %0 = vector.load %arg1[%c0, %c0_0] : memref<16x16xf32, #tpu.memory_space<vmem>>, vector<16x16xf32>
    %c0_1 = arith.constant 0 : index
    %c0_2 = arith.constant 0 : index
    %1 = vector.load %arg0[%c0_1, %c0_2] : memref<16x32xf32, #tpu.memory_space<vmem>>, vector<16x32xf32>
    %c0_3 = arith.constant 0 : index
    %c0_4 = arith.constant 0 : index
    %2 = vector.load %arg2[%c0_3, %c0_4] : memref<32x128xf32, #tpu.memory_space<vmem>>, vector<32x128xf32>
    %c0_5 = arith.constant 0 : index
    %c0_6 = arith.constant 0 : index
    %3 = vector.load %arg3[%c0_5, %c0_6] : memref<4x128xf32, #tpu.memory_space<vmem>>, vector<4x128xf32>
    %c0_7 = arith.constant 0 : index
    %c0_8 = arith.constant 0 : index
    %4 = vector.load %arg4[%c0_7, %c0_8] : memref<128x4xf32, #tpu.memory_space<vmem>>, vector<128x4xf32>
    %c0_9 = arith.constant 0 : index
    %c0_10 = arith.constant 0 : index
    %5 = vector.load %arg5[%c0_9, %c0_10] : memref<1x128xf32, #tpu.memory_space<vmem>>, vector<1x128xf32>
    %c0_11 = arith.constant 0 : index
    %c0_12 = arith.constant 0 : index
    %6 = vector.load %arg6[%c0_11, %c0_12] : memref<4x128xf32, #tpu.memory_space<vmem>>, vector<4x128xf32>
    %cst = arith.constant dense<0.000000e+00> : vector<16x128xf32>
    %7 = tpu.matmul %1, %2, %cst {dimension_numbers = #tpu.dot_dimension_numbers<[1], [0], [0], [1], [0, 0, 1, 1], [], []>} : vector<16x32xf32>, vector<32x128xf32>, vector<16x128xf32> -> vector<16x128xf32>
    %cst_13 = arith.constant dense<0.000000e+00> : vector<16x4xf32>
    %8 = tpu.matmul %7, %4, %cst_13 {dimension_numbers = #tpu.dot_dimension_numbers<[1], [0], [0], [1], [0, 0, 1, 1], [], []>} : vector<16x128xf32>, vector<128x4xf32>, vector<16x4xf32> -> vector<16x4xf32>
    %cst_14 = arith.constant dense<0.000000e+00> : vector<4x16xf32>
    %9 = tpu.matmul %3, %7, %cst_14 {dimension_numbers = #tpu.dot_dimension_numbers<[1], [1], [0], [0], [0, 0, 1, 0], [], []>} : vector<4x128xf32>, vector<16x128xf32>, vector<4x16xf32> -> vector<4x16xf32>
    %10 = vector.extract_strided_slice %8 {offsets = [0, 0], sizes = [16, 1], strides = [1, 1]} : vector<16x4xf32> to vector<16x1xf32>
    %11 = vector.extract_strided_slice %9 {offsets = [0, 0], sizes = [1, 16], strides = [1, 1]} : vector<4x16xf32> to vector<1x16xf32>
    %12 = vector.broadcast %10 : vector<16x1xf32> to vector<16x16xf32>
    %13 = vector.broadcast %11 : vector<1x16xf32> to vector<16x16xf32>
    %14 = arith.addf %12, %13 : vector<16x16xf32>
    %cst_15 = arith.constant 2.000000e-01 : f32
    %15 = vector.broadcast %cst_15 : f32 to vector<16x16xf32>
    %16 = arith.mulf %15, %14 : vector<16x16xf32>
    %17 = arith.maximumf %14, %16 : vector<16x16xf32>
    %18 = arith.addf %17, %0 : vector<16x16xf32>
    %cst_16 = arith.constant dense<0xFF800000> : vector<16xf32>
    %19 = vector.multi_reduction <maximumf>, %18, %cst_16 [1] : vector<16x16xf32> to vector<16xf32>
    %20 = vector.shape_cast %19 : vector<16xf32> to vector<16x1xf32>
    %21 = vector.broadcast %20 : vector<16x1xf32> to vector<16x16xf32>
    %22 = arith.subf %18, %21 : vector<16x16xf32>
    %23 = math.exp %22 : vector<16x16xf32>
    %cst_17 = arith.constant dense<0.000000e+00> : vector<16xf32>
    %24 = vector.multi_reduction <add>, %23, %cst_17 [1] : vector<16x16xf32> to vector<16xf32>
    %25 = vector.shape_cast %24 : vector<16xf32> to vector<16x1xf32>
    %26 = tpu.reciprocal %25 {approx = true} : vector<16x1xf32> -> vector<16x1xf32>
    %27 = vector.broadcast %26 : vector<16x1xf32> to vector<16x16xf32>
    %28 = arith.mulf %23, %27 : vector<16x16xf32>
    %cst_18 = arith.constant dense<0.000000e+00> : vector<16x128xf32>
    %29 = tpu.matmul %28, %7, %cst_18 {dimension_numbers = #tpu.dot_dimension_numbers<[1], [0], [0], [1], [0, 0, 1, 1], [], []>} : vector<16x16xf32>, vector<16x128xf32>, vector<16x128xf32> -> vector<16x128xf32>
    %30 = vector.extract_strided_slice %6 {offsets = [0, 0], sizes = [1, 128], strides = [1, 1]} : vector<4x128xf32> to vector<1x128xf32>
    %31 = vector.broadcast %30 : vector<1x128xf32> to vector<16x128xf32>
    %32 = arith.mulf %29, %31 : vector<16x128xf32>
    %33 = vector.extract_strided_slice %8 {offsets = [0, 1], sizes = [16, 1], strides = [1, 1]} : vector<16x4xf32> to vector<16x1xf32>
    %34 = vector.extract_strided_slice %9 {offsets = [1, 0], sizes = [1, 16], strides = [1, 1]} : vector<4x16xf32> to vector<1x16xf32>
    %35 = vector.broadcast %33 : vector<16x1xf32> to vector<16x16xf32>
    %36 = vector.broadcast %34 : vector<1x16xf32> to vector<16x16xf32>
    %37 = arith.addf %35, %36 : vector<16x16xf32>
    %cst_19 = arith.constant 2.000000e-01 : f32
    %38 = vector.broadcast %cst_19 : f32 to vector<16x16xf32>
    %39 = arith.mulf %38, %37 : vector<16x16xf32>
    %40 = arith.maximumf %37, %39 : vector<16x16xf32>
    %41 = arith.addf %40, %0 : vector<16x16xf32>
    %cst_20 = arith.constant dense<0xFF800000> : vector<16xf32>
    %42 = vector.multi_reduction <maximumf>, %41, %cst_20 [1] : vector<16x16xf32> to vector<16xf32>
    %43 = vector.shape_cast %42 : vector<16xf32> to vector<16x1xf32>
    %44 = vector.broadcast %43 : vector<16x1xf32> to vector<16x16xf32>
    %45 = arith.subf %41, %44 : vector<16x16xf32>
    %46 = math.exp %45 : vector<16x16xf32>
    %cst_21 = arith.constant dense<0.000000e+00> : vector<16xf32>
    %47 = vector.multi_reduction <add>, %46, %cst_21 [1] : vector<16x16xf32> to vector<16xf32>
    %48 = vector.shape_cast %47 : vector<16xf32> to vector<16x1xf32>
    %49 = tpu.reciprocal %48 {approx = true} : vector<16x1xf32> -> vector<16x1xf32>
    %50 = vector.broadcast %49 : vector<16x1xf32> to vector<16x16xf32>
    %51 = arith.mulf %46, %50 : vector<16x16xf32>
    %cst_22 = arith.constant dense<0.000000e+00> : vector<16x128xf32>
    %52 = tpu.matmul %51, %7, %cst_22 {dimension_numbers = #tpu.dot_dimension_numbers<[1], [0], [0], [1], [0, 0, 1, 1], [], []>} : vector<16x16xf32>, vector<16x128xf32>, vector<16x128xf32> -> vector<16x128xf32>
    %53 = vector.extract_strided_slice %6 {offsets = [1, 0], sizes = [1, 128], strides = [1, 1]} : vector<4x128xf32> to vector<1x128xf32>
    %54 = vector.broadcast %53 : vector<1x128xf32> to vector<16x128xf32>
    %55 = arith.mulf %52, %54 : vector<16x128xf32>
    %56 = arith.addf %32, %55 : vector<16x128xf32>
    %57 = vector.extract_strided_slice %8 {offsets = [0, 2], sizes = [16, 1], strides = [1, 1]} : vector<16x4xf32> to vector<16x1xf32>
    %58 = vector.extract_strided_slice %9 {offsets = [2, 0], sizes = [1, 16], strides = [1, 1]} : vector<4x16xf32> to vector<1x16xf32>
    %59 = vector.broadcast %57 : vector<16x1xf32> to vector<16x16xf32>
    %60 = vector.broadcast %58 : vector<1x16xf32> to vector<16x16xf32>
    %61 = arith.addf %59, %60 : vector<16x16xf32>
    %cst_23 = arith.constant 2.000000e-01 : f32
    %62 = vector.broadcast %cst_23 : f32 to vector<16x16xf32>
    %63 = arith.mulf %62, %61 : vector<16x16xf32>
    %64 = arith.maximumf %61, %63 : vector<16x16xf32>
    %65 = arith.addf %64, %0 : vector<16x16xf32>
    %cst_24 = arith.constant dense<0xFF800000> : vector<16xf32>
    %66 = vector.multi_reduction <maximumf>, %65, %cst_24 [1] : vector<16x16xf32> to vector<16xf32>
    %67 = vector.shape_cast %66 : vector<16xf32> to vector<16x1xf32>
    %68 = vector.broadcast %67 : vector<16x1xf32> to vector<16x16xf32>
    %69 = arith.subf %65, %68 : vector<16x16xf32>
    %70 = math.exp %69 : vector<16x16xf32>
    %cst_25 = arith.constant dense<0.000000e+00> : vector<16xf32>
    %71 = vector.multi_reduction <add>, %70, %cst_25 [1] : vector<16x16xf32> to vector<16xf32>
    %72 = vector.shape_cast %71 : vector<16xf32> to vector<16x1xf32>
    %73 = tpu.reciprocal %72 {approx = true} : vector<16x1xf32> -> vector<16x1xf32>
    %74 = vector.broadcast %73 : vector<16x1xf32> to vector<16x16xf32>
    %75 = arith.mulf %70, %74 : vector<16x16xf32>
    %cst_26 = arith.constant dense<0.000000e+00> : vector<16x128xf32>
    %76 = tpu.matmul %75, %7, %cst_26 {dimension_numbers = #tpu.dot_dimension_numbers<[1], [0], [0], [1], [0, 0, 1, 1], [], []>} : vector<16x16xf32>, vector<16x128xf32>, vector<16x128xf32> -> vector<16x128xf32>
    %77 = vector.extract_strided_slice %6 {offsets = [2, 0], sizes = [1, 128], strides = [1, 1]} : vector<4x128xf32> to vector<1x128xf32>
    %78 = vector.broadcast %77 : vector<1x128xf32> to vector<16x128xf32>
    %79 = arith.mulf %76, %78 : vector<16x128xf32>
    %80 = arith.addf %56, %79 : vector<16x128xf32>
    %81 = vector.extract_strided_slice %8 {offsets = [0, 3], sizes = [16, 1], strides = [1, 1]} : vector<16x4xf32> to vector<16x1xf32>
    %82 = vector.extract_strided_slice %9 {offsets = [3, 0], sizes = [1, 16], strides = [1, 1]} : vector<4x16xf32> to vector<1x16xf32>
    %83 = vector.broadcast %81 : vector<16x1xf32> to vector<16x16xf32>
    %84 = vector.broadcast %82 : vector<1x16xf32> to vector<16x16xf32>
    %85 = arith.addf %83, %84 : vector<16x16xf32>
    %cst_27 = arith.constant 2.000000e-01 : f32
    %86 = vector.broadcast %cst_27 : f32 to vector<16x16xf32>
    %87 = arith.mulf %86, %85 : vector<16x16xf32>
    %88 = arith.maximumf %85, %87 : vector<16x16xf32>
    %89 = arith.addf %88, %0 : vector<16x16xf32>
    %cst_28 = arith.constant dense<0xFF800000> : vector<16xf32>
    %90 = vector.multi_reduction <maximumf>, %89, %cst_28 [1] : vector<16x16xf32> to vector<16xf32>
    %91 = vector.shape_cast %90 : vector<16xf32> to vector<16x1xf32>
    %92 = vector.broadcast %91 : vector<16x1xf32> to vector<16x16xf32>
    %93 = arith.subf %89, %92 : vector<16x16xf32>
    %94 = math.exp %93 : vector<16x16xf32>
    %cst_29 = arith.constant dense<0.000000e+00> : vector<16xf32>
    %95 = vector.multi_reduction <add>, %94, %cst_29 [1] : vector<16x16xf32> to vector<16xf32>
    %96 = vector.shape_cast %95 : vector<16xf32> to vector<16x1xf32>
    %97 = tpu.reciprocal %96 {approx = true} : vector<16x1xf32> -> vector<16x1xf32>
    %98 = vector.broadcast %97 : vector<16x1xf32> to vector<16x16xf32>
    %99 = arith.mulf %94, %98 : vector<16x16xf32>
    %cst_30 = arith.constant dense<0.000000e+00> : vector<16x128xf32>
    %100 = tpu.matmul %99, %7, %cst_30 {dimension_numbers = #tpu.dot_dimension_numbers<[1], [0], [0], [1], [0, 0, 1, 1], [], []>} : vector<16x16xf32>, vector<16x128xf32>, vector<16x128xf32> -> vector<16x128xf32>
    %101 = vector.extract_strided_slice %6 {offsets = [3, 0], sizes = [1, 128], strides = [1, 1]} : vector<4x128xf32> to vector<1x128xf32>
    %102 = vector.broadcast %101 : vector<1x128xf32> to vector<16x128xf32>
    %103 = arith.mulf %100, %102 : vector<16x128xf32>
    %104 = arith.addf %80, %103 : vector<16x128xf32>
    %105 = vector.broadcast %5 : vector<1x128xf32> to vector<16x128xf32>
    %106 = arith.addf %104, %105 : vector<16x128xf32>
    %cst_31 = arith.constant 0.000000e+00 : f32
    %107 = vector.broadcast %cst_31 : f32 to vector<16x128xf32>
    %108 = arith.cmpf ogt, %106, %107 : vector<16x128xf32>
    %cst_32 = arith.constant 0.000000e+00 : f32
    %109 = vector.broadcast %cst_32 : f32 to vector<16x128xf32>
    %110 = arith.minimumf %106, %109 : vector<16x128xf32>
    %111 = math.exp %110 : vector<16x128xf32>
    %cst_33 = arith.constant 1.000000e+00 : f32
    %112 = vector.broadcast %cst_33 : f32 to vector<16x128xf32>
    %113 = arith.subf %111, %112 : vector<16x128xf32>
    %114 = arith.select %108, %106, %113 : vector<16x128xi1>, vector<16x128xf32>
    %c0_34 = arith.constant 0 : index
    %c0_35 = arith.constant 0 : index
    %115 = vector.load %arg7[%c0_34, %c0_35] : memref<128x128xf32, #tpu.memory_space<vmem>>, vector<128x128xf32>
    %c0_36 = arith.constant 0 : index
    %c0_37 = arith.constant 0 : index
    %116 = vector.load %arg8[%c0_36, %c0_37] : memref<4x128xf32, #tpu.memory_space<vmem>>, vector<4x128xf32>
    %c0_38 = arith.constant 0 : index
    %c0_39 = arith.constant 0 : index
    %117 = vector.load %arg9[%c0_38, %c0_39] : memref<128x4xf32, #tpu.memory_space<vmem>>, vector<128x4xf32>
    %c0_40 = arith.constant 0 : index
    %c0_41 = arith.constant 0 : index
    %118 = vector.load %arg10[%c0_40, %c0_41] : memref<1x128xf32, #tpu.memory_space<vmem>>, vector<1x128xf32>
    %c0_42 = arith.constant 0 : index
    %c0_43 = arith.constant 0 : index
    %119 = vector.load %arg11[%c0_42, %c0_43] : memref<4x128xf32, #tpu.memory_space<vmem>>, vector<4x128xf32>
    %cst_44 = arith.constant dense<0.000000e+00> : vector<16x128xf32>
    %120 = tpu.matmul %114, %115, %cst_44 {dimension_numbers = #tpu.dot_dimension_numbers<[1], [0], [0], [1], [0, 0, 1, 1], [], []>} : vector<16x128xf32>, vector<128x128xf32>, vector<16x128xf32> -> vector<16x128xf32>
    %cst_45 = arith.constant dense<0.000000e+00> : vector<16x4xf32>
    %121 = tpu.matmul %120, %117, %cst_45 {dimension_numbers = #tpu.dot_dimension_numbers<[1], [0], [0], [1], [0, 0, 1, 1], [], []>} : vector<16x128xf32>, vector<128x4xf32>, vector<16x4xf32> -> vector<16x4xf32>
    %cst_46 = arith.constant dense<0.000000e+00> : vector<4x16xf32>
    %122 = tpu.matmul %116, %120, %cst_46 {dimension_numbers = #tpu.dot_dimension_numbers<[1], [1], [0], [0], [0, 0, 1, 0], [], []>} : vector<4x128xf32>, vector<16x128xf32>, vector<4x16xf32> -> vector<4x16xf32>
    %123 = vector.extract_strided_slice %121 {offsets = [0, 0], sizes = [16, 1], strides = [1, 1]} : vector<16x4xf32> to vector<16x1xf32>
    %124 = vector.extract_strided_slice %122 {offsets = [0, 0], sizes = [1, 16], strides = [1, 1]} : vector<4x16xf32> to vector<1x16xf32>
    %125 = vector.broadcast %123 : vector<16x1xf32> to vector<16x16xf32>
    %126 = vector.broadcast %124 : vector<1x16xf32> to vector<16x16xf32>
    %127 = arith.addf %125, %126 : vector<16x16xf32>
    %cst_47 = arith.constant 2.000000e-01 : f32
    %128 = vector.broadcast %cst_47 : f32 to vector<16x16xf32>
    %129 = arith.mulf %128, %127 : vector<16x16xf32>
    %130 = arith.maximumf %127, %129 : vector<16x16xf32>
    %131 = arith.addf %130, %0 : vector<16x16xf32>
    %cst_48 = arith.constant dense<0xFF800000> : vector<16xf32>
    %132 = vector.multi_reduction <maximumf>, %131, %cst_48 [1] : vector<16x16xf32> to vector<16xf32>
    %133 = vector.shape_cast %132 : vector<16xf32> to vector<16x1xf32>
    %134 = vector.broadcast %133 : vector<16x1xf32> to vector<16x16xf32>
    %135 = arith.subf %131, %134 : vector<16x16xf32>
    %136 = math.exp %135 : vector<16x16xf32>
    %cst_49 = arith.constant dense<0.000000e+00> : vector<16xf32>
    %137 = vector.multi_reduction <add>, %136, %cst_49 [1] : vector<16x16xf32> to vector<16xf32>
    %138 = vector.shape_cast %137 : vector<16xf32> to vector<16x1xf32>
    %139 = tpu.reciprocal %138 {approx = true} : vector<16x1xf32> -> vector<16x1xf32>
    %140 = vector.broadcast %139 : vector<16x1xf32> to vector<16x16xf32>
    %141 = arith.mulf %136, %140 : vector<16x16xf32>
    %cst_50 = arith.constant dense<0.000000e+00> : vector<16x128xf32>
    %142 = tpu.matmul %141, %120, %cst_50 {dimension_numbers = #tpu.dot_dimension_numbers<[1], [0], [0], [1], [0, 0, 1, 1], [], []>} : vector<16x16xf32>, vector<16x128xf32>, vector<16x128xf32> -> vector<16x128xf32>
    %143 = vector.extract_strided_slice %119 {offsets = [0, 0], sizes = [1, 128], strides = [1, 1]} : vector<4x128xf32> to vector<1x128xf32>
    %144 = vector.broadcast %143 : vector<1x128xf32> to vector<16x128xf32>
    %145 = arith.mulf %142, %144 : vector<16x128xf32>
    %146 = vector.extract_strided_slice %121 {offsets = [0, 1], sizes = [16, 1], strides = [1, 1]} : vector<16x4xf32> to vector<16x1xf32>
    %147 = vector.extract_strided_slice %122 {offsets = [1, 0], sizes = [1, 16], strides = [1, 1]} : vector<4x16xf32> to vector<1x16xf32>
    %148 = vector.broadcast %146 : vector<16x1xf32> to vector<16x16xf32>
    %149 = vector.broadcast %147 : vector<1x16xf32> to vector<16x16xf32>
    %150 = arith.addf %148, %149 : vector<16x16xf32>
    %cst_51 = arith.constant 2.000000e-01 : f32
    %151 = vector.broadcast %cst_51 : f32 to vector<16x16xf32>
    %152 = arith.mulf %151, %150 : vector<16x16xf32>
    %153 = arith.maximumf %150, %152 : vector<16x16xf32>
    %154 = arith.addf %153, %0 : vector<16x16xf32>
    %cst_52 = arith.constant dense<0xFF800000> : vector<16xf32>
    %155 = vector.multi_reduction <maximumf>, %154, %cst_52 [1] : vector<16x16xf32> to vector<16xf32>
    %156 = vector.shape_cast %155 : vector<16xf32> to vector<16x1xf32>
    %157 = vector.broadcast %156 : vector<16x1xf32> to vector<16x16xf32>
    %158 = arith.subf %154, %157 : vector<16x16xf32>
    %159 = math.exp %158 : vector<16x16xf32>
    %cst_53 = arith.constant dense<0.000000e+00> : vector<16xf32>
    %160 = vector.multi_reduction <add>, %159, %cst_53 [1] : vector<16x16xf32> to vector<16xf32>
    %161 = vector.shape_cast %160 : vector<16xf32> to vector<16x1xf32>
    %162 = tpu.reciprocal %161 {approx = true} : vector<16x1xf32> -> vector<16x1xf32>
    %163 = vector.broadcast %162 : vector<16x1xf32> to vector<16x16xf32>
    %164 = arith.mulf %159, %163 : vector<16x16xf32>
    %cst_54 = arith.constant dense<0.000000e+00> : vector<16x128xf32>
    %165 = tpu.matmul %164, %120, %cst_54 {dimension_numbers = #tpu.dot_dimension_numbers<[1], [0], [0], [1], [0, 0, 1, 1], [], []>} : vector<16x16xf32>, vector<16x128xf32>, vector<16x128xf32> -> vector<16x128xf32>
    %166 = vector.extract_strided_slice %119 {offsets = [1, 0], sizes = [1, 128], strides = [1, 1]} : vector<4x128xf32> to vector<1x128xf32>
    %167 = vector.broadcast %166 : vector<1x128xf32> to vector<16x128xf32>
    %168 = arith.mulf %165, %167 : vector<16x128xf32>
    %169 = arith.addf %145, %168 : vector<16x128xf32>
    %170 = vector.extract_strided_slice %121 {offsets = [0, 2], sizes = [16, 1], strides = [1, 1]} : vector<16x4xf32> to vector<16x1xf32>
    %171 = vector.extract_strided_slice %122 {offsets = [2, 0], sizes = [1, 16], strides = [1, 1]} : vector<4x16xf32> to vector<1x16xf32>
    %172 = vector.broadcast %170 : vector<16x1xf32> to vector<16x16xf32>
    %173 = vector.broadcast %171 : vector<1x16xf32> to vector<16x16xf32>
    %174 = arith.addf %172, %173 : vector<16x16xf32>
    %cst_55 = arith.constant 2.000000e-01 : f32
    %175 = vector.broadcast %cst_55 : f32 to vector<16x16xf32>
    %176 = arith.mulf %175, %174 : vector<16x16xf32>
    %177 = arith.maximumf %174, %176 : vector<16x16xf32>
    %178 = arith.addf %177, %0 : vector<16x16xf32>
    %cst_56 = arith.constant dense<0xFF800000> : vector<16xf32>
    %179 = vector.multi_reduction <maximumf>, %178, %cst_56 [1] : vector<16x16xf32> to vector<16xf32>
    %180 = vector.shape_cast %179 : vector<16xf32> to vector<16x1xf32>
    %181 = vector.broadcast %180 : vector<16x1xf32> to vector<16x16xf32>
    %182 = arith.subf %178, %181 : vector<16x16xf32>
    %183 = math.exp %182 : vector<16x16xf32>
    %cst_57 = arith.constant dense<0.000000e+00> : vector<16xf32>
    %184 = vector.multi_reduction <add>, %183, %cst_57 [1] : vector<16x16xf32> to vector<16xf32>
    %185 = vector.shape_cast %184 : vector<16xf32> to vector<16x1xf32>
    %186 = tpu.reciprocal %185 {approx = true} : vector<16x1xf32> -> vector<16x1xf32>
    %187 = vector.broadcast %186 : vector<16x1xf32> to vector<16x16xf32>
    %188 = arith.mulf %183, %187 : vector<16x16xf32>
    %cst_58 = arith.constant dense<0.000000e+00> : vector<16x128xf32>
    %189 = tpu.matmul %188, %120, %cst_58 {dimension_numbers = #tpu.dot_dimension_numbers<[1], [0], [0], [1], [0, 0, 1, 1], [], []>} : vector<16x16xf32>, vector<16x128xf32>, vector<16x128xf32> -> vector<16x128xf32>
    %190 = vector.extract_strided_slice %119 {offsets = [2, 0], sizes = [1, 128], strides = [1, 1]} : vector<4x128xf32> to vector<1x128xf32>
    %191 = vector.broadcast %190 : vector<1x128xf32> to vector<16x128xf32>
    %192 = arith.mulf %189, %191 : vector<16x128xf32>
    %193 = arith.addf %169, %192 : vector<16x128xf32>
    %194 = vector.extract_strided_slice %121 {offsets = [0, 3], sizes = [16, 1], strides = [1, 1]} : vector<16x4xf32> to vector<16x1xf32>
    %195 = vector.extract_strided_slice %122 {offsets = [3, 0], sizes = [1, 16], strides = [1, 1]} : vector<4x16xf32> to vector<1x16xf32>
    %196 = vector.broadcast %194 : vector<16x1xf32> to vector<16x16xf32>
    %197 = vector.broadcast %195 : vector<1x16xf32> to vector<16x16xf32>
    %198 = arith.addf %196, %197 : vector<16x16xf32>
    %cst_59 = arith.constant 2.000000e-01 : f32
    %199 = vector.broadcast %cst_59 : f32 to vector<16x16xf32>
    %200 = arith.mulf %199, %198 : vector<16x16xf32>
    %201 = arith.maximumf %198, %200 : vector<16x16xf32>
    %202 = arith.addf %201, %0 : vector<16x16xf32>
    %cst_60 = arith.constant dense<0xFF800000> : vector<16xf32>
    %203 = vector.multi_reduction <maximumf>, %202, %cst_60 [1] : vector<16x16xf32> to vector<16xf32>
    %204 = vector.shape_cast %203 : vector<16xf32> to vector<16x1xf32>
    %205 = vector.broadcast %204 : vector<16x1xf32> to vector<16x16xf32>
    %206 = arith.subf %202, %205 : vector<16x16xf32>
    %207 = math.exp %206 : vector<16x16xf32>
    %cst_61 = arith.constant dense<0.000000e+00> : vector<16xf32>
    %208 = vector.multi_reduction <add>, %207, %cst_61 [1] : vector<16x16xf32> to vector<16xf32>
    %209 = vector.shape_cast %208 : vector<16xf32> to vector<16x1xf32>
    %210 = tpu.reciprocal %209 {approx = true} : vector<16x1xf32> -> vector<16x1xf32>
    %211 = vector.broadcast %210 : vector<16x1xf32> to vector<16x16xf32>
    %212 = arith.mulf %207, %211 : vector<16x16xf32>
    %cst_62 = arith.constant dense<0.000000e+00> : vector<16x128xf32>
    %213 = tpu.matmul %212, %120, %cst_62 {dimension_numbers = #tpu.dot_dimension_numbers<[1], [0], [0], [1], [0, 0, 1, 1], [], []>} : vector<16x16xf32>, vector<16x128xf32>, vector<16x128xf32> -> vector<16x128xf32>
    %214 = vector.extract_strided_slice %119 {offsets = [3, 0], sizes = [1, 128], strides = [1, 1]} : vector<4x128xf32> to vector<1x128xf32>
    %215 = vector.broadcast %214 : vector<1x128xf32> to vector<16x128xf32>
    %216 = arith.mulf %213, %215 : vector<16x128xf32>
    %217 = arith.addf %193, %216 : vector<16x128xf32>
    %218 = vector.broadcast %118 : vector<1x128xf32> to vector<16x128xf32>
    %219 = arith.addf %217, %218 : vector<16x128xf32>
    %cst_63 = arith.constant 0.000000e+00 : f32
    %220 = vector.broadcast %cst_63 : f32 to vector<16x128xf32>
    %221 = arith.cmpf ogt, %219, %220 : vector<16x128xf32>
    %cst_64 = arith.constant 0.000000e+00 : f32
    %222 = vector.broadcast %cst_64 : f32 to vector<16x128xf32>
    %223 = arith.minimumf %219, %222 : vector<16x128xf32>
    %224 = math.exp %223 : vector<16x128xf32>
    %cst_65 = arith.constant 1.000000e+00 : f32
    %225 = vector.broadcast %cst_65 : f32 to vector<16x128xf32>
    %226 = arith.subf %224, %225 : vector<16x128xf32>
    %227 = arith.select %221, %219, %226 : vector<16x128xi1>, vector<16x128xf32>
    %c0_66 = arith.constant 0 : index
    %c0_67 = arith.constant 0 : index
    %228 = vector.load %arg12[%c0_66, %c0_67] : memref<128x128xf32, #tpu.memory_space<vmem>>, vector<128x128xf32>
    %c0_68 = arith.constant 0 : index
    %c0_69 = arith.constant 0 : index
    %229 = vector.load %arg13[%c0_68, %c0_69] : memref<4x128xf32, #tpu.memory_space<vmem>>, vector<4x128xf32>
    %c0_70 = arith.constant 0 : index
    %c0_71 = arith.constant 0 : index
    %230 = vector.load %arg14[%c0_70, %c0_71] : memref<128x4xf32, #tpu.memory_space<vmem>>, vector<128x4xf32>
    %c0_72 = arith.constant 0 : index
    %c0_73 = arith.constant 0 : index
    %231 = vector.load %arg15[%c0_72, %c0_73] : memref<1x128xf32, #tpu.memory_space<vmem>>, vector<1x128xf32>
    %c0_74 = arith.constant 0 : index
    %c0_75 = arith.constant 0 : index
    %232 = vector.load %arg16[%c0_74, %c0_75] : memref<4x128xf32, #tpu.memory_space<vmem>>, vector<4x128xf32>
    %cst_76 = arith.constant dense<0.000000e+00> : vector<16x128xf32>
    %233 = tpu.matmul %227, %228, %cst_76 {dimension_numbers = #tpu.dot_dimension_numbers<[1], [0], [0], [1], [0, 0, 1, 1], [], []>} : vector<16x128xf32>, vector<128x128xf32>, vector<16x128xf32> -> vector<16x128xf32>
    %cst_77 = arith.constant dense<0.000000e+00> : vector<16x4xf32>
    %234 = tpu.matmul %233, %230, %cst_77 {dimension_numbers = #tpu.dot_dimension_numbers<[1], [0], [0], [1], [0, 0, 1, 1], [], []>} : vector<16x128xf32>, vector<128x4xf32>, vector<16x4xf32> -> vector<16x4xf32>
    %cst_78 = arith.constant dense<0.000000e+00> : vector<4x16xf32>
    %235 = tpu.matmul %229, %233, %cst_78 {dimension_numbers = #tpu.dot_dimension_numbers<[1], [1], [0], [0], [0, 0, 1, 0], [], []>} : vector<4x128xf32>, vector<16x128xf32>, vector<4x16xf32> -> vector<4x16xf32>
    %236 = vector.extract_strided_slice %234 {offsets = [0, 0], sizes = [16, 1], strides = [1, 1]} : vector<16x4xf32> to vector<16x1xf32>
    %237 = vector.extract_strided_slice %235 {offsets = [0, 0], sizes = [1, 16], strides = [1, 1]} : vector<4x16xf32> to vector<1x16xf32>
    %238 = vector.broadcast %236 : vector<16x1xf32> to vector<16x16xf32>
    %239 = vector.broadcast %237 : vector<1x16xf32> to vector<16x16xf32>
    %240 = arith.addf %238, %239 : vector<16x16xf32>
    %cst_79 = arith.constant 2.000000e-01 : f32
    %241 = vector.broadcast %cst_79 : f32 to vector<16x16xf32>
    %242 = arith.mulf %241, %240 : vector<16x16xf32>
    %243 = arith.maximumf %240, %242 : vector<16x16xf32>
    %244 = arith.addf %243, %0 : vector<16x16xf32>
    %cst_80 = arith.constant dense<0xFF800000> : vector<16xf32>
    %245 = vector.multi_reduction <maximumf>, %244, %cst_80 [1] : vector<16x16xf32> to vector<16xf32>
    %246 = vector.shape_cast %245 : vector<16xf32> to vector<16x1xf32>
    %247 = vector.broadcast %246 : vector<16x1xf32> to vector<16x16xf32>
    %248 = arith.subf %244, %247 : vector<16x16xf32>
    %249 = math.exp %248 : vector<16x16xf32>
    %cst_81 = arith.constant dense<0.000000e+00> : vector<16xf32>
    %250 = vector.multi_reduction <add>, %249, %cst_81 [1] : vector<16x16xf32> to vector<16xf32>
    %251 = vector.shape_cast %250 : vector<16xf32> to vector<16x1xf32>
    %252 = tpu.reciprocal %251 {approx = true} : vector<16x1xf32> -> vector<16x1xf32>
    %253 = vector.broadcast %252 : vector<16x1xf32> to vector<16x16xf32>
    %254 = arith.mulf %249, %253 : vector<16x16xf32>
    %cst_82 = arith.constant dense<0.000000e+00> : vector<16x128xf32>
    %255 = tpu.matmul %254, %233, %cst_82 {dimension_numbers = #tpu.dot_dimension_numbers<[1], [0], [0], [1], [0, 0, 1, 1], [], []>} : vector<16x16xf32>, vector<16x128xf32>, vector<16x128xf32> -> vector<16x128xf32>
    %256 = vector.extract_strided_slice %232 {offsets = [0, 0], sizes = [1, 128], strides = [1, 1]} : vector<4x128xf32> to vector<1x128xf32>
    %257 = vector.broadcast %256 : vector<1x128xf32> to vector<16x128xf32>
    %258 = arith.mulf %255, %257 : vector<16x128xf32>
    %259 = vector.extract_strided_slice %234 {offsets = [0, 1], sizes = [16, 1], strides = [1, 1]} : vector<16x4xf32> to vector<16x1xf32>
    %260 = vector.extract_strided_slice %235 {offsets = [1, 0], sizes = [1, 16], strides = [1, 1]} : vector<4x16xf32> to vector<1x16xf32>
    %261 = vector.broadcast %259 : vector<16x1xf32> to vector<16x16xf32>
    %262 = vector.broadcast %260 : vector<1x16xf32> to vector<16x16xf32>
    %263 = arith.addf %261, %262 : vector<16x16xf32>
    %cst_83 = arith.constant 2.000000e-01 : f32
    %264 = vector.broadcast %cst_83 : f32 to vector<16x16xf32>
    %265 = arith.mulf %264, %263 : vector<16x16xf32>
    %266 = arith.maximumf %263, %265 : vector<16x16xf32>
    %267 = arith.addf %266, %0 : vector<16x16xf32>
    %cst_84 = arith.constant dense<0xFF800000> : vector<16xf32>
    %268 = vector.multi_reduction <maximumf>, %267, %cst_84 [1] : vector<16x16xf32> to vector<16xf32>
    %269 = vector.shape_cast %268 : vector<16xf32> to vector<16x1xf32>
    %270 = vector.broadcast %269 : vector<16x1xf32> to vector<16x16xf32>
    %271 = arith.subf %267, %270 : vector<16x16xf32>
    %272 = math.exp %271 : vector<16x16xf32>
    %cst_85 = arith.constant dense<0.000000e+00> : vector<16xf32>
    %273 = vector.multi_reduction <add>, %272, %cst_85 [1] : vector<16x16xf32> to vector<16xf32>
    %274 = vector.shape_cast %273 : vector<16xf32> to vector<16x1xf32>
    %275 = tpu.reciprocal %274 {approx = true} : vector<16x1xf32> -> vector<16x1xf32>
    %276 = vector.broadcast %275 : vector<16x1xf32> to vector<16x16xf32>
    %277 = arith.mulf %272, %276 : vector<16x16xf32>
    %cst_86 = arith.constant dense<0.000000e+00> : vector<16x128xf32>
    %278 = tpu.matmul %277, %233, %cst_86 {dimension_numbers = #tpu.dot_dimension_numbers<[1], [0], [0], [1], [0, 0, 1, 1], [], []>} : vector<16x16xf32>, vector<16x128xf32>, vector<16x128xf32> -> vector<16x128xf32>
    %279 = vector.extract_strided_slice %232 {offsets = [1, 0], sizes = [1, 128], strides = [1, 1]} : vector<4x128xf32> to vector<1x128xf32>
    %280 = vector.broadcast %279 : vector<1x128xf32> to vector<16x128xf32>
    %281 = arith.mulf %278, %280 : vector<16x128xf32>
    %282 = arith.addf %258, %281 : vector<16x128xf32>
    %283 = vector.extract_strided_slice %234 {offsets = [0, 2], sizes = [16, 1], strides = [1, 1]} : vector<16x4xf32> to vector<16x1xf32>
    %284 = vector.extract_strided_slice %235 {offsets = [2, 0], sizes = [1, 16], strides = [1, 1]} : vector<4x16xf32> to vector<1x16xf32>
    %285 = vector.broadcast %283 : vector<16x1xf32> to vector<16x16xf32>
    %286 = vector.broadcast %284 : vector<1x16xf32> to vector<16x16xf32>
    %287 = arith.addf %285, %286 : vector<16x16xf32>
    %cst_87 = arith.constant 2.000000e-01 : f32
    %288 = vector.broadcast %cst_87 : f32 to vector<16x16xf32>
    %289 = arith.mulf %288, %287 : vector<16x16xf32>
    %290 = arith.maximumf %287, %289 : vector<16x16xf32>
    %291 = arith.addf %290, %0 : vector<16x16xf32>
    %cst_88 = arith.constant dense<0xFF800000> : vector<16xf32>
    %292 = vector.multi_reduction <maximumf>, %291, %cst_88 [1] : vector<16x16xf32> to vector<16xf32>
    %293 = vector.shape_cast %292 : vector<16xf32> to vector<16x1xf32>
    %294 = vector.broadcast %293 : vector<16x1xf32> to vector<16x16xf32>
    %295 = arith.subf %291, %294 : vector<16x16xf32>
    %296 = math.exp %295 : vector<16x16xf32>
    %cst_89 = arith.constant dense<0.000000e+00> : vector<16xf32>
    %297 = vector.multi_reduction <add>, %296, %cst_89 [1] : vector<16x16xf32> to vector<16xf32>
    %298 = vector.shape_cast %297 : vector<16xf32> to vector<16x1xf32>
    %299 = tpu.reciprocal %298 {approx = true} : vector<16x1xf32> -> vector<16x1xf32>
    %300 = vector.broadcast %299 : vector<16x1xf32> to vector<16x16xf32>
    %301 = arith.mulf %296, %300 : vector<16x16xf32>
    %cst_90 = arith.constant dense<0.000000e+00> : vector<16x128xf32>
    %302 = tpu.matmul %301, %233, %cst_90 {dimension_numbers = #tpu.dot_dimension_numbers<[1], [0], [0], [1], [0, 0, 1, 1], [], []>} : vector<16x16xf32>, vector<16x128xf32>, vector<16x128xf32> -> vector<16x128xf32>
    %303 = vector.extract_strided_slice %232 {offsets = [2, 0], sizes = [1, 128], strides = [1, 1]} : vector<4x128xf32> to vector<1x128xf32>
    %304 = vector.broadcast %303 : vector<1x128xf32> to vector<16x128xf32>
    %305 = arith.mulf %302, %304 : vector<16x128xf32>
    %306 = arith.addf %282, %305 : vector<16x128xf32>
    %307 = vector.extract_strided_slice %234 {offsets = [0, 3], sizes = [16, 1], strides = [1, 1]} : vector<16x4xf32> to vector<16x1xf32>
    %308 = vector.extract_strided_slice %235 {offsets = [3, 0], sizes = [1, 16], strides = [1, 1]} : vector<4x16xf32> to vector<1x16xf32>
    %309 = vector.broadcast %307 : vector<16x1xf32> to vector<16x16xf32>
    %310 = vector.broadcast %308 : vector<1x16xf32> to vector<16x16xf32>
    %311 = arith.addf %309, %310 : vector<16x16xf32>
    %cst_91 = arith.constant 2.000000e-01 : f32
    %312 = vector.broadcast %cst_91 : f32 to vector<16x16xf32>
    %313 = arith.mulf %312, %311 : vector<16x16xf32>
    %314 = arith.maximumf %311, %313 : vector<16x16xf32>
    %315 = arith.addf %314, %0 : vector<16x16xf32>
    %cst_92 = arith.constant dense<0xFF800000> : vector<16xf32>
    %316 = vector.multi_reduction <maximumf>, %315, %cst_92 [1] : vector<16x16xf32> to vector<16xf32>
    %317 = vector.shape_cast %316 : vector<16xf32> to vector<16x1xf32>
    %318 = vector.broadcast %317 : vector<16x1xf32> to vector<16x16xf32>
    %319 = arith.subf %315, %318 : vector<16x16xf32>
    %320 = math.exp %319 : vector<16x16xf32>
    %cst_93 = arith.constant dense<0.000000e+00> : vector<16xf32>
    %321 = vector.multi_reduction <add>, %320, %cst_93 [1] : vector<16x16xf32> to vector<16xf32>
    %322 = vector.shape_cast %321 : vector<16xf32> to vector<16x1xf32>
    %323 = tpu.reciprocal %322 {approx = true} : vector<16x1xf32> -> vector<16x1xf32>
    %324 = vector.broadcast %323 : vector<16x1xf32> to vector<16x16xf32>
    %325 = arith.mulf %320, %324 : vector<16x16xf32>
    %cst_94 = arith.constant dense<0.000000e+00> : vector<16x128xf32>
    %326 = tpu.matmul %325, %233, %cst_94 {dimension_numbers = #tpu.dot_dimension_numbers<[1], [0], [0], [1], [0, 0, 1, 1], [], []>} : vector<16x16xf32>, vector<16x128xf32>, vector<16x128xf32> -> vector<16x128xf32>
    %327 = vector.extract_strided_slice %232 {offsets = [3, 0], sizes = [1, 128], strides = [1, 1]} : vector<4x128xf32> to vector<1x128xf32>
    %328 = vector.broadcast %327 : vector<1x128xf32> to vector<16x128xf32>
    %329 = arith.mulf %326, %328 : vector<16x128xf32>
    %330 = arith.addf %306, %329 : vector<16x128xf32>
    %c0_95 = arith.constant 0 : index
    %c0_96 = arith.constant 0 : index
    %331 = vector.load %arg17[%c0_95, %c0_96] : memref<128x128xf32, #tpu.memory_space<vmem>>, vector<128x128xf32>
    %cst_97 = arith.constant dense<0.000000e+00> : vector<16x128xf32>
    %332 = tpu.matmul %330, %331, %cst_97 {dimension_numbers = #tpu.dot_dimension_numbers<[1], [0], [0], [1], [0, 0, 1, 1], [], []>} : vector<16x128xf32>, vector<128x128xf32>, vector<16x128xf32> -> vector<16x128xf32>
    %333 = vector.broadcast %231 : vector<1x128xf32> to vector<16x128xf32>
    %334 = arith.addf %332, %333 : vector<16x128xf32>
    %c0_98 = arith.constant 0 : index
    %c0_99 = arith.constant 0 : index
    %335 = vector.load %arg18[%c0_98, %c0_99] : memref<16x128xf32, #tpu.memory_space<vmem>>, vector<16x128xf32>
    tpu.vector_store %arg18[%c0_98, %c0_99], %334 {strides = array<i32>} : memref<16x128xf32, #tpu.memory_space<vmem>>, vector<16x128xf32>,
    return
  }
}

</mosaic_0001>

<llo_original>
// kernel: tpu_custom_call.1
$region0: #{tpu_custom_call.1}
  #allocation0 [shape = 'u32[]', space=smem, size = 0x4, offset = 0x4, fixed_abs, tag = 'smem constant byte address 0x4 - core index']
  #allocation1 [shape = 'u32[72,128]{1,0:T(1,128)}', space=vmem, size = 0x9000, scoped, tag = 'internal scratch']
  %s0 = inlined_call_operand.hbm [shape: f32[16,32], index: 0, kind: input, shape index: {}]
  %s1 = inlined_call_operand.hbm [shape: f32[16,16], index: 1, kind: input, shape index: {}]
  %s2 = inlined_call_operand.hbm [shape: f32[32,128], index: 2, kind: input, shape index: {}]
  %s3 = inlined_call_operand.vmem [shape: f32[4,128], index: 3, kind: input, shape index: {}]
  %s4 = inlined_call_operand.vmem [shape: f32[128,4], index: 4, kind: input, shape index: {}]
  %s5 = inlined_call_operand.hbm [shape: f32[1,128], index: 5, kind: input, shape index: {}]
  %s6 = inlined_call_operand.vmem [shape: f32[4,128], index: 6, kind: input, shape index: {}]
  %s7 = inlined_call_operand.vmem [shape: f32[128,128], index: 7, kind: input, shape index: {}]
  %s8 = inlined_call_operand.hbm [shape: f32[4,128], index: 8, kind: input, shape index: {}]
  %s9 = inlined_call_operand.vmem [shape: f32[128,4], index: 9, kind: input, shape index: {}]
  %s10 = inlined_call_operand.vmem [shape: f32[1,128], index: 10, kind: input, shape index: {}]
  %s11 = inlined_call_operand.vmem [shape: f32[4,128], index: 11, kind: input, shape index: {}]
  %s12 = inlined_call_operand.vmem [shape: f32[128,128], index: 12, kind: input, shape index: {}]
  %s13 = inlined_call_operand.hbm [shape: f32[4,128], index: 13, kind: input, shape index: {}]
  %s14 = inlined_call_operand.vmem [shape: f32[128,4], index: 14, kind: input, shape index: {}]
  %s15 = inlined_call_operand.vmem [shape: f32[1,128], index: 15, kind: input, shape index: {}]
  %s16 = inlined_call_operand.vmem [shape: f32[4,128], index: 16, kind: input, shape index: {}]
  %s17 = inlined_call_operand.vmem [shape: f32[128,128], index: 17, kind: input, shape index: {}]
  %s18 = inlined_call_operand.hbm [shape: f32[16,128], index: 18, kind: output, shape index: {}]
  %s19 = sld [smem:[#allocation0]]
  $region106: #{tpu_custom_call.1} parent=0
    _
  %s21 = ssub.s32 1, %s19
  %s22 = scalar_select 0, %s21, %s19
  $region1: #{tpu_custom_call.1} parent=0
    #allocation2 [shape = 'u8[8192]{0}', space=vmem, size = 0x2000, scoped, tag = 'input window, operand 0, single buffered']
    #allocation3 [shape = 's32[1]{0}', space=sflag, size = 0x4, scoped, tag = 'scoped memory for tpu_custom_call.1']
    #allocation4 [shape = 's32[1]{0}', space=sflag, size = 0x4, scoped, tag = 'scoped memory for tpu_custom_call.1']
    #allocation5 [shape = 'u8[8192]{0}', space=vmem, size = 0x2000, scoped, tag = 'input window, operand 1, single buffered']
    #allocation6 [shape = 's32[1]{0}', space=sflag, size = 0x4, scoped, tag = 'scoped memory for tpu_custom_call.1']
    #allocation7 [shape = 'u8[16384]{0}', space=vmem, size = 0x4000, scoped, tag = 'input window, operand 2, single buffered']
    #allocation8 [shape = 'u8[512]{0}', space=vmem, size = 0x400, scoped, tag = 'input window, operand 5, single buffered']
    #allocation9 [shape = 's32[1]{0}', space=sflag, size = 0x4, scoped, tag = 'scoped memory for tpu_custom_call.1']
    #allocation10 [shape = 'u8[2048]{0}', space=vmem, size = 0x800, scoped, tag = 'input window, operand 8, single buffered']
    #allocation11 [shape = 'u8[2048]{0}', space=vmem, size = 0x800, scoped, tag = 'input window, operand 13, single buffered']
    #allocation12 [shape = 's32[1]{0}', space=sflag, size = 0x4, scoped, tag = 'scoped memory for tpu_custom_call.1']
    #allocation13 [shape = 'u8[8192]{0}', space=vmem, size = 0x2000, scoped, tag = 'output window, operand 0, single buffered']
    %23 = vsyncpa [#allocation3], 0
    %24 = vsyncpa [#allocation6], 0
    %25 = vsyncpa [#allocation9], 0
    %26 = vsyncpa [#allocation12], 0
    %27 = vsyncpa [#allocation4], 0
    // Predicated region
    $region2: #{tpu_custom_call.1} parent=1 // pred_check
      _
    $region3: #{tpu_custom_call.1} parent=1 // pred_check_branch
      %29 = sbr.rel (0) target = $region5
    $region4: #{tpu_custom_call.1} parent=1 // pred_region
      %31 = vsyncadd [#allocation3], 0
      %s32 = sshll.u32 %s0, 4
      %s33 = int_to_ptr.hbm [resolvable:$true] %s32
      %s34 = sshll.u32 [#allocation2], 4
      %s35 = int_to_ptr.vmem [resolvable:$true] %s34
      %40 = dma.hbm_to_vmem [thread:$0]  %s33, 256, %s35, [#allocation3], 128, 128, 8
    $region5: #{tpu_custom_call.1} parent=1 // pred_fallthru
      _
    // Predicated region
    $region6: #{tpu_custom_call.1} parent=1 // pred_check
      _
    $region7: #{tpu_custom_call.1} parent=1 // pred_check_branch
      %42 = sbr.rel (0) target = $region9
    $region8: #{tpu_custom_call.1} parent=1 // pred_region
      %44 = vsyncadd [#allocation6], 0
      %s45 = sshll.u32 %s1, 4
      %s46 = int_to_ptr.hbm [resolvable:$true] %s45
      %s47 = sshll.u32 [#allocation5], 4
      %s48 = int_to_ptr.vmem [resolvable:$true] %s47
      %53 = dma.hbm_to_vmem [thread:$0]  %s46, 256, %s48, [#allocation6], 128, 128, 8
    $region9: #{tpu_custom_call.1} parent=1 // pred_fallthru
      _
    // Predicated region
    $region10: #{tpu_custom_call.1} parent=1 // pred_check
      _
    $region11: #{tpu_custom_call.1} parent=1 // pred_check_branch
      %55 = sbr.rel (0) target = $region13
    $region12: #{tpu_custom_call.1} parent=1 // pred_region
      %57 = vsyncadd [#allocation6], 0
      %s58 = sshll.u32 %s2, 4
      %s59 = int_to_ptr.hbm [resolvable:$true] %s58
      %s60 = sshll.u32 [#allocation7], 4
      %s61 = int_to_ptr.vmem [resolvable:$true] %s60
      %66 = dma.hbm_to_vmem [thread:$0]  %s59, 512, %s61, [#allocation6], 128, 128, 8
    $region13: #{tpu_custom_call.1} parent=1 // pred_fallthru
      _
    // Predicated region
    $region14: #{tpu_custom_call.1} parent=1 // pred_check
      _
    $region15: #{tpu_custom_call.1} parent=1 // pred_check_branch
      %68 = sbr.rel (0) target = $region17
    $region16: #{tpu_custom_call.1} parent=1 // pred_region
      _
    $region17: #{tpu_custom_call.1} parent=1 // pred_fallthru
      _
    // Predicated region
    $region18: #{tpu_custom_call.1} parent=1 // pred_check
      _
    $region19: #{tpu_custom_call.1} parent=1 // pred_check_branch
      %70 = sbr.rel (0) target = $region21
    $region20: #{tpu_custom_call.1} parent=1 // pred_region
      _
    $region21: #{tpu_custom_call.1} parent=1 // pred_fallthru
      _
    // Predicated region
    $region22: #{tpu_custom_call.1} parent=1 // pred_check
      _
    $region23: #{tpu_custom_call.1} parent=1 // pred_check_branch
      %72 = sbr.rel (0) target = $region25
    $region24: #{tpu_custom_call.1} parent=1 // pred_region
      %74 = vsyncadd [#allocation9], 0
      %s76 = sshll.u32 %s5, 4
      %s77 = int_to_ptr.hbm [resolvable:$true] %s76
      %s78 = sshll.u32 [#allocation8], 4
      %s79 = int_to_ptr.vmem [resolvable:$true] %s78
      %81 = dma.hbm_to_vmem [thread:$0]  %s77, 16, %s79, [#allocation9]
    $region25: #{tpu_custom_call.1} parent=1 // pred_fallthru
      _
    // Predicated region
    $region26: #{tpu_custom_call.1} parent=1 // pred_check
      _
    $region27: #{tpu_custom_call.1} parent=1 // pred_check_branch
      %83 = sbr.rel (0) target = $region29
    $region28: #{tpu_custom_call.1} parent=1 // pred_region
      _
    $region29: #{tpu_custom_call.1} parent=1 // pred_fallthru
      _
    // Predicated region
    $region30: #{tpu_custom_call.1} parent=1 // pred_check
      _
    $region31: #{tpu_custom_call.1} parent=1 // pred_check_branch
      %85 = sbr.rel (0) target = $region33
    $region32: #{tpu_custom_call.1} parent=1 // pred_region
      _
    $region33: #{tpu_custom_call.1} parent=1 // pred_fallthru
      _
    // Predicated region
    $region34: #{tpu_custom_call.1} parent=1 // pred_check
      _
    $region35: #{tpu_custom_call.1} parent=1 // pred_check_branch
      %87 = sbr.rel (0) target = $region37
    $region36: #{tpu_custom_call.1} parent=1 // pred_region
      %89 = vsyncadd [#allocation9], 0
      %s91 = sshll.u32 %s8, 4
      %s92 = int_to_ptr.hbm [resolvable:$true] %s91
      %s93 = sshll.u32 [#allocation10], 4
      %s94 = int_to_ptr.vmem [resolvable:$true] %s93
      %96 = dma.hbm_to_vmem [thread:$0]  %s92, 64, %s94, [#allocation9]
    $region37: #{tpu_custom_call.1} parent=1 // pred_fallthru
      _
    // Predicated region
    $region38: #{tpu_custom_call.1} parent=1 // pred_check
      _
    $region39: #{tpu_custom_call.1} parent=1 // pred_check_branch
      %98 = sbr.rel (0) target = $region41
    $region40: #{tpu_custom_call.1} parent=1 // pred_region
      _
    $region41: #{tpu_custom_call.1} parent=1 // pred_fallthru
      _
    // Predicated region
    $region42: #{tpu_custom_call.1} parent=1 // pred_check
      _
    $region43: #{tpu_custom_call.1} parent=1 // pred_check_branch
      %100 = sbr.rel (0) target = $region45
    $region44: #{tpu_custom_call.1} parent=1 // pred_region
      _
    $region45: #{tpu_custom_call.1} parent=1 // pred_fallthru
      _
    // Predicated region
    $region46: #{tpu_custom_call.1} parent=1 // pred_check
      _
    $region47: #{tpu_custom_call.1} parent=1 // pred_check_branch
      %102 = sbr.rel (0) target = $region49
    $region48: #{tpu_custom_call.1} parent=1 // pred_region
      _
    $region49: #{tpu_custom_call.1} parent=1 // pred_fallthru
      _
    // Predicated region
    $region50: #{tpu_custom_call.1} parent=1 // pred_check
      _
    $region51: #{tpu_custom_call.1} parent=1 // pred_check_branch
      %104 = sbr.rel (0) target = $region53
    $region52: #{tpu_custom_call.1} parent=1 // pred_region
      _
    $region53: #{tpu_custom_call.1} parent=1 // pred_fallthru
      _
    // Predicated region
    $region54: #{tpu_custom_call.1} parent=1 // pred_check
      _
    $region55: #{tpu_custom_call.1} parent=1 // pred_check_branch
      %106 = sbr.rel (0) target = $region57
    $region56: #{tpu_custom_call.1} parent=1 // pred_region
      %108 = vsyncadd [#allocation12], 0
      %s110 = sshll.u32 %s13, 4
      %s111 = int_to_ptr.hbm [resolvable:$true] %s110
      %s112 = sshll.u32 [#allocation11], 4
      %s113 = int_to_ptr.vmem [resolvable:$true] %s112
      %115 = dma.hbm_to_vmem [thread:$0]  %s111, 64, %s113, [#allocation12]
    $region57: #{tpu_custom_call.1} parent=1 // pred_fallthru
      _
    // Predicated region
    $region58: #{tpu_custom_call.1} parent=1 // pred_check
      _
    $region59: #{tpu_custom_call.1} parent=1 // pred_check_branch
      %117 = sbr.rel (0) target = $region61
    $region60: #{tpu_custom_call.1} parent=1 // pred_region
      _
    $region61: #{tpu_custom_call.1} parent=1 // pred_fallthru
      _
    // Predicated region
    $region62: #{tpu_custom_call.1} parent=1 // pred_check
      _
    $region63: #{tpu_custom_call.1} parent=1 // pred_check_branch
      %119 = sbr.rel (0) target = $region65
    $region64: #{tpu_custom_call.1} parent=1 // pred_region
      _
    $region65: #{tpu_custom_call.1} parent=1 // pred_fallthru
      _
    // Predicated region
    $region66: #{tpu_custom_call.1} parent=1 // pred_check
      _
    $region67: #{tpu_custom_call.1} parent=1 // pred_check_branch
      %121 = sbr.rel (0) target = $region69
    $region68: #{tpu_custom_call.1} parent=1 // pred_region
      _
    $region69: #{tpu_custom_call.1} parent=1 // pred_fallthru
      _
    // Predicated region
    $region70: #{tpu_custom_call.1} parent=1 // pred_check
      _
    $region71: #{tpu_custom_call.1} parent=1 // pred_check_branch
      %123 = sbr.rel (0) target = $region73
    $region72: #{tpu_custom_call.1} parent=1 // pred_region
      _
    $region73: #{tpu_custom_call.1} parent=1 // pred_fallthru
      _
    // Predicated region
    $region74: #{tpu_custom_call.1} parent=1 // pred_check
      _
    $region75: #{tpu_custom_call.1} parent=1 // pred_check_branch
      %125 = sbr.rel (0) target = $region77
    $region76: #{tpu_custom_call.1} parent=1 // pred_region
      %127 = dma.done [#allocation3], 256
    $region77: #{tpu_custom_call.1} parent=1 // pred_fallthru
      _
    // Predicated region
    $region78: #{tpu_custom_call.1} parent=1 // pred_check
      _
    $region79: #{tpu_custom_call.1} parent=1 // pred_check_branch
      %129 = sbr.rel (0) target = $region81
    $region80: #{tpu_custom_call.1} parent=1 // pred_region
      %131 = dma.done [#allocation6], 256
    $region81: #{tpu_custom_call.1} parent=1 // pred_fallthru
      _
    // Predicated region
    $region82: #{tpu_custom_call.1} parent=1 // pred_check
      _
    $region83: #{tpu_custom_call.1} parent=1 // pred_check_branch
      %133 = sbr.rel (0) target = $region85
    $region84: #{tpu_custom_call.1} parent=1 // pred_region
      %135 = dma.done [#allocation6], 512
    $region85: #{tpu_custom_call.1} parent=1 // pred_fallthru
      _
    // Predicated region
    $region86: #{tpu_custom_call.1} parent=1 // pred_check
      _
    $region87: #{tpu_custom_call.1} parent=1 // pred_check_branch
      %137 = sbr.rel (0) target = $region89
    $region88: #{tpu_custom_call.1} parent=1 // pred_region
      %139 = dma.done [#allocation9], 16
    $region89: #{tpu_custom_call.1} parent=1 // pred_fallthru
      _
    // Predicated region
    $region90: #{tpu_custom_call.1} parent=1 // pred_check
      _
    $region91: #{tpu_custom_call.1} parent=1 // pred_check_branch
      %141 = sbr.rel (0) target = $region93
    $region92: #{tpu_custom_call.1} parent=1 // pred_region
      %143 = dma.done [#allocation9], 64
    $region93: #{tpu_custom_call.1} parent=1 // pred_fallthru
      _
    // Predicated region
    $region94: #{tpu_custom_call.1} parent=1 // pred_check
      _
    $region95: #{tpu_custom_call.1} parent=1 // pred_check_branch
      %145 = sbr.rel (0) target = $region97
    $region96: #{tpu_custom_call.1} parent=1 // pred_region
      %147 = dma.done [#allocation12], 64
    $region97: #{tpu_custom_call.1} parent=1 // pred_fallthru
      _
    %v148 = vld [vmem:[#allocation5] sm:$0xff]
    %v149 = vld [vmem:[#allocation5 + $0x8] sm:$0xff]
    %v150 = vld [vmem:[#allocation2] sm:$0xff]
    %v151 = vld [vmem:[#allocation2 + $0x8] sm:$0xff]
    %v152 = vld [vmem:[#allocation7] sm:$0xff]
    %v153 = vld [vmem:[#allocation7 + $0x8] sm:$0xff]
    %v154 = vld [vmem:[#allocation7 + $0x10] sm:$0xff]
    %v155 = vld [vmem:[#allocation7 + $0x18] sm:$0xff]
    %v156 = vld [vmem:[%s3] sm:$0xf]
    %v157 = vld [vmem:[%s4] sm:$0xff]
    %v158 = vld [vmem:[%s4 + $0x8] sm:$0xff]
    %v159 = vld [vmem:[%s4 + $0x10] sm:$0xff]
    %v160 = vld [vmem:[%s4 + $0x18] sm:$0xff]
    %v161 = vld [vmem:[%s4 + $0x20] sm:$0xff]
    %v162 = vld [vmem:[%s4 + $0x28] sm:$0xff]
    %v163 = vld [vmem:[%s4 + $0x30] sm:$0xff]
    %v164 = vld [vmem:[%s4 + $0x38] sm:$0xff]
    %v165 = vld [vmem:[%s4 + $0x40] sm:$0xff]
    %v166 = vld [vmem:[%s4 + $0x48] sm:$0xff]
    %v167 = vld [vmem:[%s4 + $0x50] sm:$0xff]
    %v168 = vld [vmem:[%s4 + $0x58] sm:$0xff]
    %v169 = vld [vmem:[%s4 + $0x60] sm:$0xff]
    %v170 = vld [vmem:[%s4 + $0x68] sm:$0xff]
    %v171 = vld [vmem:[%s4 + $0x70] sm:$0xff]
    %v172 = vld [vmem:[%s4 + $0x78] sm:$0xff]
    %v173 = vld [vmem:[#allocation8] sm:$0x1]
    %v174 = vld [vmem:[%s6] sm:$0xf]
    %vm175 = vcmask 261120
    %v177 = vsel %vm175, %v150, 0
    %v180 = vsel %vm175, %v151, 0
    %182 = vmatpush.msra.mxu0 0.0
    %183 = vmatpush.msra.mxu0 0.0
    %184 = vmatpush.msra.mxu0 0.0
    %185 = vmatpush.msra.mxu0 0.0
    %186 = vmatpush.msra.mxu0 0.0
    %187 = vmatpush.msra.mxu0 0.0
    %188 = vmatpush.msra.mxu0 0.0
    %189 = vmatpush.msra.mxu0 0.0
    %190 = vmatpush.msra.mxu0 0.0
    %191 = vmatpush.msra.mxu0 0.0
    %192 = vmatpush.msra.mxu0 0.0
    %193 = vmatpush.msra.mxu0 0.0
    %194 = vmatpush.msra.mxu0 %v155
    %195 = vmatpush.msra.mxu0 %v154
    %196 = vmatpush.msra.mxu0 %v153
    %197 = vmatpush.msra.mxu0 %v152
    %198 = vmatmul.f32.gmra.mxu0 %v177
    %v199 = vpop.f32.mrf.mxu0
    %v200 = vadd.f32 0.0, %v199
    %201 = vmatmul.f32.gmra.mxu0 %v180
    %v202 = vpop.f32.mrf.mxu0
    %v203 = vadd.f32 0.0, %v202
    %204 = vdwg.mxu0
    %205 = vmatpush.msra.mxu0 %v172
    %206 = vmatpush.msra.mxu0 %v171
    %207 = vmatpush.msra.mxu0 %v170
    %208 = vmatpush.msra.mxu0 %v169
    %209 = vmatpush.msra.mxu0 %v168
    %210 = vmatpush.msra.mxu0 %v167
    %211 = vmatpush.msra.mxu0 %v166
    %212 = vmatpush.msra.mxu0 %v165
    %213 = vmatpush.msra.mxu0 %v164
    %214 = vmatpush.msra.mxu0 %v163
    %215 = vmatpush.msra.mxu0 %v162
    %216 = vmatpush.msra.mxu0 %v161
    %217 = vmatpush.msra.mxu0 %v160
    %218 = vmatpush.msra.mxu0 %v159
    %219 = vmatpush.msra.mxu0 %v158
    %220 = vmatpush.msra.mxu0 %v157
    %221 = vmatmul.f32.gmra.mxu0 %v200
    %v222 = vpop.f32.mrf.mxu0
    %v223 = vadd.f32 0.0, %v222
    %224 = vmatmul.f32.gmra.mxu0 %v203
    %v225 = vpop.f32.mrf.mxu0
    %v226 = vadd.f32 0.0, %v225
    %227 = vdwg.mxu0
    %228 = vmatpush.xpose.msra.mxu0 0.0
    %229 = vmatpush.xpose.msra.mxu0 0.0
    %230 = vmatpush.xpose.msra.mxu0 0.0
    %231 = vmatpush.xpose.msra.mxu0 0.0
    %232 = vmatpush.xpose.msra.mxu0 0.0
    %233 = vmatpush.xpose.msra.mxu0 0.0
    %234 = vmatpush.xpose.msra.mxu0 0.0
    %235 = vmatpush.xpose.msra.mxu0 0.0
    %236 = vmatpush.xpose.msra.mxu0 0.0
    %237 = vmatpush.xpose.msra.mxu0 0.0
    %238 = vmatpush.xpose.msra.mxu0 0.0
    %239 = vmatpush.xpose.msra.mxu0 0.0
    %240 = vmatpush.xpose.msra.mxu0 0.0
    %241 = vmatpush.xpose.msra.mxu0 0.0
    %242 = vmatpush.xpose.msra.mxu0 %v203
    %243 = vmatpush.xpose.msra.mxu0 %v200
    %244 = vmatmul.f32.gmra.mxu0 %v156
    %v245 = vpop.f32.mrf.mxu0
    %v246 = vadd.f32 0.0, %v245
    %247 = vdwg.mxu0
    %249 = vset.pattern.permute.xlu0 0
    %250 = vperm.xlu0 %249, %v223
    %v251 = vpop.permute.xlu0 %250
    %254 = vset.pattern.permute.xlu0 0
    %255 = vperm.xlu0 %254, %v226
    %v256 = vpop.permute.xlu0 %255
    %v258 = vperm.slane %v246, 0
    %v259 = vadd.f32 %v251, %v258
    %v260 = vadd.f32 %v256, %v258
    %v261 = vmul.f32 %v259, 0.2
    %v262 = vmul.f32 %v260, 0.2
    %v263 = vmax.f32 %v259, %v261
    %v264 = vmax.f32 %v260, %v262
    %v265 = vadd.f32 %v263, %v148
    %v266 = vadd.f32 %v264, %v149
    %vm267 = vcmask 130048
    %v268 = vsel %vm267, %v265, -inf
    %269 = vmax.xlane.f32.xlu0 %v268
    %v270 = vpop.xlane.xlu0 %269
    %v271 = vsel %vm267, %v266, -inf
    %272 = vmax.xlane.f32.xlu0 %v271
    %v273 = vpop.xlane.xlu0 %272
    %v274 = vsub.f32 %v265, %v270
    %v275 = vsub.f32 %v266, %v273
    %v276 = vmul.f32 %v274, 1.442695
    %v277 = vpow.pop %v276
    %v278 = vmul.f32 %v275, 1.442695
    %v279 = vpow.pop %v278
    %v280 = vsel %vm267, %v277, 0.0
    %281 = vadd.xlane.f32.xlu0 %v280
    %v282 = vpop.xlane.xlu0 %281
    %v283 = vsel %vm267, %v279, 0.0
    %284 = vadd.xlane.f32.xlu0 %v283
    %v285 = vpop.xlane.xlu0 %284
    %v286 = vrcp.pop %v282
    %v287 = vrcp.pop %v285
    %v288 = vmul.f32 %v277, %v286
    %v289 = vmul.f32 %v279, %v287
    %v291 = vsel %vm267, %v288, 0
    %v294 = vsel %vm267, %v289, 0
    %296 = vmatpush.msra.mxu0 0.0
    %297 = vmatpush.msra.mxu0 0.0
    %298 = vmatpush.msra.mxu0 0.0
    %299 = vmatpush.msra.mxu0 0.0
    %300 = vmatpush.msra.mxu0 0.0
    %301 = vmatpush.msra.mxu0 0.0
    %302 = vmatpush.msra.mxu0 0.0
    %303 = vmatpush.msra.mxu0 0.0
    %304 = vmatpush.msra.mxu0 0.0
    %305 = vmatpush.msra.mxu0 0.0
    %306 = vmatpush.msra.mxu0 0.0
    %307 = vmatpush.msra.mxu0 0.0
    %308 = vmatpush.msra.mxu0 0.0
    %309 = vmatpush.msra.mxu0 0.0
    %310 = vmatpush.msra.mxu0 %v203
    %311 = vmatpush.msra.mxu0 %v200
    %312 = vmatmul.f32.gmra.mxu0 %v291
    %v313 = vpop.f32.mrf.mxu0
    %v314 = vadd.f32 0.0, %v313
    %315 = vmatmul.f32.gmra.mxu0 %v294
    %v316 = vpop.f32.mrf.mxu0
    %v317 = vadd.f32 0.0, %v316
    %318 = vdwg.mxu0
    %v319 = vperm.slane %v174, 0
    %v320 = vmul.f32 %v314, %v319
    %v321 = vmul.f32 %v317, %v319
    %322 = vset.pattern.permute.xlu0 1
    %323 = vperm.xlu0 %322, %v223
    %v324 = vpop.permute.xlu0 %323
    %326 = vset.pattern.permute.xlu0 1
    %327 = vperm.xlu0 %326, %v226
    %v328 = vpop.permute.xlu0 %327
    %v330 = vperm.slane %v246, 1
    %v331 = vadd.f32 %v324, %v330
    %v332 = vadd.f32 %v328, %v330
    %v333 = vmul.f32 %v331, 0.2
    %v334 = vmul.f32 %v332, 0.2
    %v335 = vmax.f32 %v331, %v333
    %v336 = vmax.f32 %v332, %v334
    %v337 = vadd.f32 %v335, %v148
    %v338 = vadd.f32 %v336, %v149
    %v339 = vsel %vm267, %v337, -inf
    %340 = vmax.xlane.f32.xlu0 %v339
    %v341 = vpop.xlane.xlu0 %340
    %v342 = vsel %vm267, %v338, -inf
    %343 = vmax.xlane.f32.xlu0 %v342
    %v344 = vpop.xlane.xlu0 %343
    %v345 = vsub.f32 %v337, %v341
    %v346 = vsub.f32 %v338, %v344
    %v347 = vmul.f32 %v345, 1.442695
    %v348 = vpow.pop %v347
    %v349 = vmul.f32 %v346, 1.442695
    %v350 = vpow.pop %v349
    %v351 = vsel %vm267, %v348, 0.0
    %352 = vadd.xlane.f32.xlu0 %v351
    %v353 = vpop.xlane.xlu0 %352
    %v354 = vsel %vm267, %v350, 0.0
    %355 = vadd.xlane.f32.xlu0 %v354
    %v356 = vpop.xlane.xlu0 %355
    %v357 = vrcp.pop %v353
    %v358 = vrcp.pop %v356
    %v359 = vmul.f32 %v348, %v357
    %v360 = vmul.f32 %v350, %v358
    %v362 = vsel %vm267, %v359, 0
    %v365 = vsel %vm267, %v360, 0
    %367 = vmatpush.msra.mxu0 0.0
    %368 = vmatpush.msra.mxu0 0.0
    %369 = vmatpush.msra.mxu0 0.0
    %370 = vmatpush.msra.mxu0 0.0
    %371 = vmatpush.msra.mxu0 0.0
    %372 = vmatpush.msra.mxu0 0.0
    %373 = vmatpush.msra.mxu0 0.0
    %374 = vmatpush.msra.mxu0 0.0
    %375 = vmatpush.msra.mxu0 0.0
    %376 = vmatpush.msra.mxu0 0.0
    %377 = vmatpush.msra.mxu0 0.0
    %378 = vmatpush.msra.mxu0 0.0
    %379 = vmatpush.msra.mxu0 0.0
    %380 = vmatpush.msra.mxu0 0.0
    %381 = vmatpush.msra.mxu0 %v203
    %382 = vmatpush.msra.mxu0 %v200
    %383 = vmatmul.f32.gmra.mxu0 %v362
    %v384 = vpop.f32.mrf.mxu0
    %v385 = vadd.f32 0.0, %v384
    %386 = vmatmul.f32.gmra.mxu0 %v365
    %v387 = vpop.f32.mrf.mxu0
    %v388 = vadd.f32 0.0, %v387
    %389 = vdwg.mxu0
    %v390 = vperm.slane %v174, 1
    %v391 = vmul.f32 %v385, %v390
    %v392 = vmul.f32 %v388, %v390
    %v393 = vadd.f32 %v320, %v391
    %v394 = vadd.f32 %v321, %v392
    %395 = vset.pattern.permute.xlu0 2
    %396 = vperm.xlu0 %395, %v223
    %v397 = vpop.permute.xlu0 %396
    %399 = vset.pattern.permute.xlu0 2
    %400 = vperm.xlu0 %399, %v226
    %v401 = vpop.permute.xlu0 %400
    %v403 = vperm.slane %v246, 2
    %v404 = vadd.f32 %v397, %v403
    %v405 = vadd.f32 %v401, %v403
    %v406 = vmul.f32 %v404, 0.2
    %v407 = vmul.f32 %v405, 0.2
    %v408 = vmax.f32 %v404, %v406
    %v409 = vmax.f32 %v405, %v407
    %v410 = vadd.f32 %v408, %v148
    %v411 = vadd.f32 %v409, %v149
    %v412 = vsel %vm267, %v410, -inf
    %413 = vmax.xlane.f32.xlu0 %v412
    %v414 = vpop.xlane.xlu0 %413
    %v415 = vsel %vm267, %v411, -inf
    %416 = vmax.xlane.f32.xlu0 %v415
    %v417 = vpop.xlane.xlu0 %416
    %v418 = vsub.f32 %v410, %v414
    %v419 = vsub.f32 %v411, %v417
    %v420 = vmul.f32 %v418, 1.442695
    %v421 = vpow.pop %v420
    %v422 = vmul.f32 %v419, 1.442695
    %v423 = vpow.pop %v422
    %v424 = vsel %vm267, %v421, 0.0
    %425 = vadd.xlane.f32.xlu0 %v424
    %v426 = vpop.xlane.xlu0 %425
    %v427 = vsel %vm267, %v423, 0.0
    %428 = vadd.xlane.f32.xlu0 %v427
    %v429 = vpop.xlane.xlu0 %428
    %v430 = vrcp.pop %v426
    %v431 = vrcp.pop %v429
    %v432 = vmul.f32 %v421, %v430
    %v433 = vmul.f32 %v423, %v431
    %v435 = vsel %vm267, %v432, 0
    %v438 = vsel %vm267, %v433, 0
    %440 = vmatpush.msra.mxu0 0.0
    %441 = vmatpush.msra.mxu0 0.0
    %442 = vmatpush.msra.mxu0 0.0
    %443 = vmatpush.msra.mxu0 0.0
    %444 = vmatpush.msra.mxu0 0.0
    %445 = vmatpush.msra.mxu0 0.0
    %446 = vmatpush.msra.mxu0 0.0
    %447 = vmatpush.msra.mxu0 0.0
    %448 = vmatpush.msra.mxu0 0.0
    %449 = vmatpush.msra.mxu0 0.0
    %450 = vmatpush.msra.mxu0 0.0
    %451 = vmatpush.msra.mxu0 0.0
    %452 = vmatpush.msra.mxu0 0.0
    %453 = vmatpush.msra.mxu0 0.0
    %454 = vmatpush.msra.mxu0 %v203
    %455 = vmatpush.msra.mxu0 %v200
    %456 = vmatmul.f32.gmra.mxu0 %v435
    %v457 = vpop.f32.mrf.mxu0
    %v458 = vadd.f32 0.0, %v457
    %459 = vmatmul.f32.gmra.mxu0 %v438
    %v460 = vpop.f32.mrf.mxu0
    %v461 = vadd.f32 0.0, %v460
    %462 = vdwg.mxu0
    %v463 = vperm.slane %v174, 2
    %v464 = vmul.f32 %v458, %v463
    %v465 = vmul.f32 %v461, %v463
    %v466 = vadd.f32 %v393, %v464
    %v467 = vadd.f32 %v394, %v465
    %468 = vset.pattern.permute.xlu0 3
    %469 = vperm.xlu0 %468, %v223
    %v470 = vpop.permute.xlu0 %469
    %472 = vset.pattern.permute.xlu0 3
    %473 = vperm.xlu0 %472, %v226
    %v474 = vpop.permute.xlu0 %473
    %v476 = vperm.slane %v246, 3
    %v477 = vadd.f32 %v470, %v476
    %v478 = vadd.f32 %v474, %v476
    %v479 = vmul.f32 %v477, 0.2
    %v480 = vmul.f32 %v478, 0.2
    %v481 = vmax.f32 %v477, %v479
    %v482 = vmax.f32 %v478, %v480
    %v483 = vadd.f32 %v481, %v148
    %v484 = vadd.f32 %v482, %v149
    %v485 = vsel %vm267, %v483, -inf
    %486 = vmax.xlane.f32.xlu0 %v485
    %v487 = vpop.xlane.xlu0 %486
    %v488 = vsel %vm267, %v484, -inf
    %489 = vmax.xlane.f32.xlu0 %v488
    %v490 = vpop.xlane.xlu0 %489
    %v491 = vsub.f32 %v483, %v487
    %v492 = vsub.f32 %v484, %v490
    %v493 = vmul.f32 %v491, 1.442695
    %v494 = vpow.pop %v493
    %v495 = vmul.f32 %v492, 1.442695
    %v496 = vpow.pop %v495
    %v497 = vsel %vm267, %v494, 0.0
    %498 = vadd.xlane.f32.xlu0 %v497
    %v499 = vpop.xlane.xlu0 %498
    %v500 = vsel %vm267, %v496, 0.0
    %501 = vadd.xlane.f32.xlu0 %v500
    %v502 = vpop.xlane.xlu0 %501
    %v503 = vrcp.pop %v499
    %v504 = vrcp.pop %v502
    %v505 = vmul.f32 %v494, %v503
    %v506 = vmul.f32 %v496, %v504
    %v508 = vsel %vm267, %v505, 0
    %v511 = vsel %vm267, %v506, 0
    %513 = vmatpush.msra.mxu0 0.0
    %514 = vmatpush.msra.mxu0 0.0
    %515 = vmatpush.msra.mxu0 0.0
    %516 = vmatpush.msra.mxu0 0.0
    %517 = vmatpush.msra.mxu0 0.0
    %518 = vmatpush.msra.mxu0 0.0
    %519 = vmatpush.msra.mxu0 0.0
    %520 = vmatpush.msra.mxu0 0.0
    %521 = vmatpush.msra.mxu0 0.0
    %522 = vmatpush.msra.mxu0 0.0
    %523 = vmatpush.msra.mxu0 0.0
    %524 = vmatpush.msra.mxu0 0.0
    %525 = vmatpush.msra.mxu0 0.0
    %526 = vmatpush.msra.mxu0 0.0
    %527 = vmatpush.msra.mxu0 %v203
    %528 = vmatpush.msra.mxu0 %v200
    %529 = vmatmul.f32.gmra.mxu0 %v508
    %v530 = vpop.f32.mrf.mxu0
    %v531 = vadd.f32 0.0, %v530
    %532 = vmatmul.f32.gmra.mxu0 %v511
    %v533 = vpop.f32.mrf.mxu0
    %v534 = vadd.f32 0.0, %v533
    %535 = vdwg.mxu0
    %v536 = vperm.slane %v174, 3
    %v537 = vmul.f32 %v531, %v536
    %v538 = vmul.f32 %v534, %v536
    %v539 = vadd.f32 %v466, %v537
    %v540 = vadd.f32 %v467, %v538
    %v542 = vperm.slane %v173, 0
    %v544 = vadd.f32 %v539, %v542
    %v545 = vadd.f32 %v540, %v542
    %vm546 = vcmp.gt.f32.partialorder %v544, 0.0
    %vm547 = vcmp.gt.f32.partialorder %v545, 0.0
    %v548 = vmin.f32 %v544, 0.0
    %v549 = vmin.f32 %v545, 0.0
    %v550 = vmul.f32 %v548, 1.442695
    %v551 = vpow.pop %v550
    %v552 = vmul.f32 %v549, 1.442695
    %v553 = vpow.pop %v552
    %v554 = vsub.f32 %v551, 1.0
    %v555 = vsub.f32 %v553, 1.0
    %v556 = vsel %vm546, %v544, %v554
    %v557 = vsel %vm547, %v545, %v555
    %v558 = vld [vmem:[%s7] sm:$0xff]
    %v559 = vld [vmem:[%s7 + $0x8] sm:$0xff]
    %v560 = vld [vmem:[%s7 + $0x10] sm:$0xff]
    %v561 = vld [vmem:[%s7 + $0x18] sm:$0xff]
    %v562 = vld [vmem:[%s7 + $0x20] sm:$0xff]
    %v563 = vld [vmem:[%s7 + $0x28] sm:$0xff]
    %v564 = vld [vmem:[%s7 + $0x30] sm:$0xff]
    %v565 = vld [vmem:[%s7 + $0x38] sm:$0xff]
    %v566 = vld [vmem:[%s7 + $0x40] sm:$0xff]
    %v567 = vld [vmem:[%s7 + $0x48] sm:$0xff]
    %v568 = vld [vmem:[%s7 + $0x50] sm:$0xff]
    %v569 = vld [vmem:[%s7 + $0x58] sm:$0xff]
    %v570 = vld [vmem:[%s7 + $0x60] sm:$0xff]
    %v571 = vld [vmem:[%s7 + $0x68] sm:$0xff]
    %v572 = vld [vmem:[%s7 + $0x70] sm:$0xff]
    %v573 = vld [vmem:[%s7 + $0x78] sm:$0xff]
    %v574 = vld [vmem:[#allocation10] sm:$0xf]
    %v575 = vld [vmem:[%s9] sm:$0xff]
    %v576 = vld [vmem:[%s9 + $0x8] sm:$0xff]
    %v577 = vld [vmem:[%s9 + $0x10] sm:$0xff]
    %v578 = vld [vmem:[%s9 + $0x18] sm:$0xff]
    %v579 = vld [vmem:[%s9 + $0x20] sm:$0xff]
    %v580 = vld [vmem:[%s9 + $0x28] sm:$0xff]
    %v581 = vld [vmem:[%s9 + $0x30] sm:$0xff]
    %v582 = vld [vmem:[%s9 + $0x38] sm:$0xff]
    %v583 = vld [vmem:[%s9 + $0x40] sm:$0xff]
    %v584 = vld [vmem:[%s9 + $0x48] sm:$0xff]
    %v585 = vld [vmem:[%s9 + $0x50] sm:$0xff]
    %v586 = vld [vmem:[%s9 + $0x58] sm:$0xff]
    %v587 = vld [vmem:[%s9 + $0x60] sm:$0xff]
    %v588 = vld [vmem:[%s9 + $0x68] sm:$0xff]
    %v589 = vld [vmem:[%s9 + $0x70] sm:$0xff]
    %v590 = vld [vmem:[%s9 + $0x78] sm:$0xff]
    %v591 = vld [vmem:[%s10] sm:$0x1]
    %v592 = vld [vmem:[%s11] sm:$0xf]
    %593 = vmatpush.msra.mxu0 %v573
    %594 = vmatpush.msra.mxu0 %v572
    %595 = vmatpush.msra.mxu0 %v571
    %596 = vmatpush.msra.mxu0 %v570
    %597 = vmatpush.msra.mxu0 %v569
    %598 = vmatpush.msra.mxu0 %v568
    %599 = vmatpush.msra.mxu0 %v567
    %600 = vmatpush.msra.mxu0 %v566
    %601 = vmatpush.msra.mxu0 %v565
    %602 = vmatpush.msra.mxu0 %v564
    %603 = vmatpush.msra.mxu0 %v563
    %604 = vmatpush.msra.mxu0 %v562
    %605 = vmatpush.msra.mxu0 %v561
    %606 = vmatpush.msra.mxu0 %v560
    %607 = vmatpush.msra.mxu0 %v559
    %608 = vmatpush.msra.mxu0 %v558
    %609 = vmatmul.f32.gmra.mxu0 %v556
    %v610 = vpop.f32.mrf.mxu0
    %v611 = vadd.f32 0.0, %v610
    %612 = vmatmul.f32.gmra.mxu0 %v557
    %v613 = vpop.f32.mrf.mxu0
    %v614 = vadd.f32 0.0, %v613
    %615 = vdwg.mxu0
    %616 = vmatpush.msra.mxu0 %v590
    %617 = vmatpush.msra.mxu0 %v589
    %618 = vmatpush.msra.mxu0 %v588
    %619 = vmatpush.msra.mxu0 %v587
    %620 = vmatpush.msra.mxu0 %v586
    %621 = vmatpush.msra.mxu0 %v585
    %622 = vmatpush.msra.mxu0 %v584
    %623 = vmatpush.msra.mxu0 %v583
    %624 = vmatpush.msra.mxu0 %v582
    %625 = vmatpush.msra.mxu0 %v581
    %626 = vmatpush.msra.mxu0 %v580
    %627 = vmatpush.msra.mxu0 %v579
    %628 = vmatpush.msra.mxu0 %v578
    %629 = vmatpush.msra.mxu0 %v577
    %630 = vmatpush.msra.mxu0 %v576
    %631 = vmatpush.msra.mxu0 %v575
    %632 = vmatmul.f32.gmra.mxu0 %v611
    %v633 = vpop.f32.mrf.mxu0
    %v634 = vadd.f32 0.0, %v633
    %635 = vmatmul.f32.gmra.mxu0 %v614
    %v636 = vpop.f32.mrf.mxu0
    %v637 = vadd.f32 0.0, %v636
    %638 = vdwg.mxu0
    %639 = vmatpush.xpose.msra.mxu0 0.0
    %640 = vmatpush.xpose.msra.mxu0 0.0
    %641 = vmatpush.xpose.msra.mxu0 0.0
    %642 = vmatpush.xpose.msra.mxu0 0.0
    %643 = vmatpush.xpose.msra.mxu0 0.0
    %644 = vmatpush.xpose.msra.mxu0 0.0
    %645 = vmatpush.xpose.msra.mxu0 0.0
    %646 = vmatpush.xpose.msra.mxu0 0.0
    %647 = vmatpush.xpose.msra.mxu0 0.0
    %648 = vmatpush.xpose.msra.mxu0 0.0
    %649 = vmatpush.xpose.msra.mxu0 0.0
    %650 = vmatpush.xpose.msra.mxu0 0.0
    %651 = vmatpush.xpose.msra.mxu0 0.0
    %652 = vmatpush.xpose.msra.mxu0 0.0
    %653 = vmatpush.xpose.msra.mxu0 %v614
    %654 = vmatpush.xpose.msra.mxu0 %v611
    %655 = vmatmul.f32.gmra.mxu0 %v574
    %v656 = vpop.f32.mrf.mxu0
    %v657 = vadd.f32 0.0, %v656
    %658 = vdwg.mxu0
    %660 = vset.pattern.permute.xlu0 0
    %661 = vperm.xlu0 %660, %v634
    %v662 = vpop.permute.xlu0 %661
    %665 = vset.pattern.permute.xlu0 0
    %666 = vperm.xlu0 %665, %v637
    %v667 = vpop.permute.xlu0 %666
    %v669 = vperm.slane %v657, 0
    %v670 = vadd.f32 %v662, %v669
    %v671 = vadd.f32 %v667, %v669
    %v672 = vmul.f32 %v670, 0.2
    %v673 = vmul.f32 %v671, 0.2
    %v674 = vmax.f32 %v670, %v672
    %v675 = vmax.f32 %v671, %v673
    %v676 = vadd.f32 %v674, %v148
    %v677 = vadd.f32 %v675, %v149
    %v678 = vsel %vm267, %v676, -inf
    %679 = vmax.xlane.f32.xlu0 %v678
    %v680 = vpop.xlane.xlu0 %679
    %v681 = vsel %vm267, %v677, -inf
    %682 = vmax.xlane.f32.xlu0 %v681
    %v683 = vpop.xlane.xlu0 %682
    %v684 = vsub.f32 %v676, %v680
    %v685 = vsub.f32 %v677, %v683
    %v686 = vmul.f32 %v684, 1.442695
    %v687 = vpow.pop %v686
    %v688 = vmul.f32 %v685, 1.442695
    %v689 = vpow.pop %v688
    %v690 = vsel %vm267, %v687, 0.0
    %691 = vadd.xlane.f32.xlu0 %v690
    %v692 = vpop.xlane.xlu0 %691
    %v693 = vsel %vm267, %v689, 0.0
    %694 = vadd.xlane.f32.xlu0 %v693
    %v695 = vpop.xlane.xlu0 %694
    %v696 = vrcp.pop %v692
    %v697 = vrcp.pop %v695
    %v698 = vmul.f32 %v687, %v696
    %v699 = vmul.f32 %v689, %v697
    %v701 = vsel %vm267, %v698, 0
    %v704 = vsel %vm267, %v699, 0
    %706 = vmatpush.msra.mxu0 0.0
    %707 = vmatpush.msra.mxu0 0.0
    %708 = vmatpush.msra.mxu0 0.0
    %709 = vmatpush.msra.mxu0 0.0
    %710 = vmatpush.msra.mxu0 0.0
    %711 = vmatpush.msra.mxu0 0.0
    %712 = vmatpush.msra.mxu0 0.0
    %713 = vmatpush.msra.mxu0 0.0
    %714 = vmatpush.msra.mxu0 0.0
    %715 = vmatpush.msra.mxu0 0.0
    %716 = vmatpush.msra.mxu0 0.0
    %717 = vmatpush.msra.mxu0 0.0
    %718 = vmatpush.msra.mxu0 0.0
    %719 = vmatpush.msra.mxu0 0.0
    %720 = vmatpush.msra.mxu0 %v614
    %721 = vmatpush.msra.mxu0 %v611
    %722 = vmatmul.f32.gmra.mxu0 %v701
    %v723 = vpop.f32.mrf.mxu0
    %v724 = vadd.f32 0.0, %v723
    %725 = vmatmul.f32.gmra.mxu0 %v704
    %v726 = vpop.f32.mrf.mxu0
    %v727 = vadd.f32 0.0, %v726
    %728 = vdwg.mxu0
    %v729 = vperm.slane %v592, 0
    %v730 = vmul.f32 %v724, %v729
    %v731 = vmul.f32 %v727, %v729
    %732 = vset.pattern.permute.xlu0 1
    %733 = vperm.xlu0 %732, %v634
    %v734 = vpop.permute.xlu0 %733
    %736 = vset.pattern.permute.xlu0 1
    %737 = vperm.xlu0 %736, %v637
    %v738 = vpop.permute.xlu0 %737
    %v740 = vperm.slane %v657, 1
    %v741 = vadd.f32 %v734, %v740
    %v742 = vadd.f32 %v738, %v740
    %v743 = vmul.f32 %v741, 0.2
    %v744 = vmul.f32 %v742, 0.2
    %v745 = vmax.f32 %v741, %v743
    %v746 = vmax.f32 %v742, %v744
    %v747 = vadd.f32 %v745, %v148
    %v748 = vadd.f32 %v746, %v149
    %v749 = vsel %vm267, %v747, -inf
    %750 = vmax.xlane.f32.xlu0 %v749
    %v751 = vpop.xlane.xlu0 %750
    %v752 = vsel %vm267, %v748, -inf
    %753 = vmax.xlane.f32.xlu0 %v752
    %v754 = vpop.xlane.xlu0 %753
    %v755 = vsub.f32 %v747, %v751
    %v756 = vsub.f32 %v748, %v754
    %v757 = vmul.f32 %v755, 1.442695
    %v758 = vpow.pop %v757
    %v759 = vmul.f32 %v756, 1.442695
    %v760 = vpow.pop %v759
    %v761 = vsel %vm267, %v758, 0.0
    %762 = vadd.xlane.f32.xlu0 %v761
    %v763 = vpop.xlane.xlu0 %762
    %v764 = vsel %vm267, %v760, 0.0
    %765 = vadd.xlane.f32.xlu0 %v764
    %v766 = vpop.xlane.xlu0 %765
    %v767 = vrcp.pop %v763
    %v768 = vrcp.pop %v766
    %v769 = vmul.f32 %v758, %v767
    %v770 = vmul.f32 %v760, %v768
    %v772 = vsel %vm267, %v769, 0
    %v775 = vsel %vm267, %v770, 0
    %777 = vmatpush.msra.mxu0 0.0
    %778 = vmatpush.msra.mxu0 0.0
    %779 = vmatpush.msra.mxu0 0.0
    %780 = vmatpush.msra.mxu0 0.0
    %781 = vmatpush.msra.mxu0 0.0
    %782 = vmatpush.msra.mxu0 0.0
    %783 = vmatpush.msra.mxu0 0.0
    %784 = vmatpush.msra.mxu0 0.0
    %785 = vmatpush.msra.mxu0 0.0
    %786 = vmatpush.msra.mxu0 0.0
    %787 = vmatpush.msra.mxu0 0.0
    %788 = vmatpush.msra.mxu0 0.0
    %789 = vmatpush.msra.mxu0 0.0
    %790 = vmatpush.msra.mxu0 0.0
    %791 = vmatpush.msra.mxu0 %v614
    %792 = vmatpush.msra.mxu0 %v611
    %793 = vmatmul.f32.gmra.mxu0 %v772
    %v794 = vpop.f32.mrf.mxu0
    %v795 = vadd.f32 0.0, %v794
    %796 = vmatmul.f32.gmra.mxu0 %v775
    %v797 = vpop.f32.mrf.mxu0
    %v798 = vadd.f32 0.0, %v797
    %799 = vdwg.mxu0
    %v800 = vperm.slane %v592, 1
    %v801 = vmul.f32 %v795, %v800
    %v802 = vmul.f32 %v798, %v800
    %v803 = vadd.f32 %v730, %v801
    %v804 = vadd.f32 %v731, %v802
    %805 = vset.pattern.permute.xlu0 2
    %806 = vperm.xlu0 %805, %v634
    %v807 = vpop.permute.xlu0 %806
    %809 = vset.pattern.permute.xlu0 2
    %810 = vperm.xlu0 %809, %v637
    %v811 = vpop.permute.xlu0 %810
    %v813 = vperm.slane %v657, 2
    %v814 = vadd.f32 %v807, %v813
    %v815 = vadd.f32 %v811, %v813
    %v816 = vmul.f32 %v814, 0.2
    %v817 = vmul.f32 %v815, 0.2
    %v818 = vmax.f32 %v814, %v816
    %v819 = vmax.f32 %v815, %v817
    %v820 = vadd.f32 %v818, %v148
    %v821 = vadd.f32 %v819, %v149
    %v822 = vsel %vm267, %v820, -inf
    %823 = vmax.xlane.f32.xlu0 %v822
    %v824 = vpop.xlane.xlu0 %823
    %v825 = vsel %vm267, %v821, -inf
    %826 = vmax.xlane.f32.xlu0 %v825
    %v827 = vpop.xlane.xlu0 %826
    %v828 = vsub.f32 %v820, %v824
    %v829 = vsub.f32 %v821, %v827
    %v830 = vmul.f32 %v828, 1.442695
    %v831 = vpow.pop %v830
    %v832 = vmul.f32 %v829, 1.442695
    %v833 = vpow.pop %v832
    %v834 = vsel %vm267, %v831, 0.0
    %835 = vadd.xlane.f32.xlu0 %v834
    %v836 = vpop.xlane.xlu0 %835
    %v837 = vsel %vm267, %v833, 0.0
    %838 = vadd.xlane.f32.xlu0 %v837
    %v839 = vpop.xlane.xlu0 %838
    %v840 = vrcp.pop %v836
    %v841 = vrcp.pop %v839
    %v842 = vmul.f32 %v831, %v840
    %v843 = vmul.f32 %v833, %v841
    %v845 = vsel %vm267, %v842, 0
    %v848 = vsel %vm267, %v843, 0
    %850 = vmatpush.msra.mxu0 0.0
    %851 = vmatpush.msra.mxu0 0.0
    %852 = vmatpush.msra.mxu0 0.0
    %853 = vmatpush.msra.mxu0 0.0
    %854 = vmatpush.msra.mxu0 0.0
    %855 = vmatpush.msra.mxu0 0.0
    %856 = vmatpush.msra.mxu0 0.0
    %857 = vmatpush.msra.mxu0 0.0
    %858 = vmatpush.msra.mxu0 0.0
    %859 = vmatpush.msra.mxu0 0.0
    %860 = vmatpush.msra.mxu0 0.0
    %861 = vmatpush.msra.mxu0 0.0
    %862 = vmatpush.msra.mxu0 0.0
    %863 = vmatpush.msra.mxu0 0.0
    %864 = vmatpush.msra.mxu0 %v614
    %865 = vmatpush.msra.mxu0 %v611
    %866 = vmatmul.f32.gmra.mxu0 %v845
    %v867 = vpop.f32.mrf.mxu0
    %v868 = vadd.f32 0.0, %v867
    %869 = vmatmul.f32.gmra.mxu0 %v848
    %v870 = vpop.f32.mrf.mxu0
    %v871 = vadd.f32 0.0, %v870
    %872 = vdwg.mxu0
    %v873 = vperm.slane %v592, 2
    %v874 = vmul.f32 %v868, %v873
    %v875 = vmul.f32 %v871, %v873
    %v876 = vadd.f32 %v803, %v874
    %v877 = vadd.f32 %v804, %v875
    %878 = vset.pattern.permute.xlu0 3
    %879 = vperm.xlu0 %878, %v634
    %v880 = vpop.permute.xlu0 %879
    %882 = vset.pattern.permute.xlu0 3
    %883 = vperm.xlu0 %882, %v637
    %v884 = vpop.permute.xlu0 %883
    %v886 = vperm.slane %v657, 3
    %v887 = vadd.f32 %v880, %v886
    %v888 = vadd.f32 %v884, %v886
    %v889 = vmul.f32 %v887, 0.2
    %v890 = vmul.f32 %v888, 0.2
    %v891 = vmax.f32 %v887, %v889
    %v892 = vmax.f32 %v888, %v890
    %v893 = vadd.f32 %v891, %v148
    %v894 = vadd.f32 %v892, %v149
    %v895 = vsel %vm267, %v893, -inf
    %896 = vmax.xlane.f32.xlu0 %v895
    %v897 = vpop.xlane.xlu0 %896
    %v898 = vsel %vm267, %v894, -inf
    %899 = vmax.xlane.f32.xlu0 %v898
    %v900 = vpop.xlane.xlu0 %899
    %v901 = vsub.f32 %v893, %v897
    %v902 = vsub.f32 %v894, %v900
    %v903 = vmul.f32 %v901, 1.442695
    %v904 = vpow.pop %v903
    %v905 = vmul.f32 %v902, 1.442695
    %v906 = vpow.pop %v905
    %v907 = vsel %vm267, %v904, 0.0
    %908 = vadd.xlane.f32.xlu0 %v907
    %v909 = vpop.xlane.xlu0 %908
    %v910 = vsel %vm267, %v906, 0.0
    %911 = vadd.xlane.f32.xlu0 %v910
    %v912 = vpop.xlane.xlu0 %911
    %v913 = vrcp.pop %v909
    %v914 = vrcp.pop %v912
    %v915 = vmul.f32 %v904, %v913
    %v916 = vmul.f32 %v906, %v914
    %v918 = vsel %vm267, %v915, 0
    %v921 = vsel %vm267, %v916, 0
    %923 = vmatpush.msra.mxu0 0.0
    %924 = vmatpush.msra.mxu0 0.0
    %925 = vmatpush.msra.mxu0 0.0
    %926 = vmatpush.msra.mxu0 0.0
    %927 = vmatpush.msra.mxu0 0.0
    %928 = vmatpush.msra.mxu0 0.0
    %929 = vmatpush.msra.mxu0 0.0
    %930 = vmatpush.msra.mxu0 0.0
    %931 = vmatpush.msra.mxu0 0.0
    %932 = vmatpush.msra.mxu0 0.0
    %933 = vmatpush.msra.mxu0 0.0
    %934 = vmatpush.msra.mxu0 0.0
    %935 = vmatpush.msra.mxu0 0.0
    %936 = vmatpush.msra.mxu0 0.0
    %937 = vmatpush.msra.mxu0 %v614
    %938 = vmatpush.msra.mxu0 %v611
    %939 = vmatmul.f32.gmra.mxu0 %v918
    %v940 = vpop.f32.mrf.mxu0
    %v941 = vadd.f32 0.0, %v940
    %942 = vmatmul.f32.gmra.mxu0 %v921
    %v943 = vpop.f32.mrf.mxu0
    %v944 = vadd.f32 0.0, %v943
    %945 = vdwg.mxu0
    %v946 = vperm.slane %v592, 3
    %v947 = vmul.f32 %v941, %v946
    %v948 = vmul.f32 %v944, %v946
    %v949 = vadd.f32 %v876, %v947
    %v950 = vadd.f32 %v877, %v948
    %v952 = vperm.slane %v591, 0
    %v954 = vadd.f32 %v949, %v952
    %v955 = vadd.f32 %v950, %v952
    %vm956 = vcmp.gt.f32.partialorder %v954, 0.0
    %vm957 = vcmp.gt.f32.partialorder %v955, 0.0
    %v958 = vmin.f32 %v954, 0.0
    %v959 = vmin.f32 %v955, 0.0
    %v960 = vmul.f32 %v958, 1.442695
    %v961 = vpow.pop %v960
    %v962 = vmul.f32 %v959, 1.442695
    %v963 = vpow.pop %v962
    %v964 = vsub.f32 %v961, 1.0
    %v965 = vsub.f32 %v963, 1.0
    %v966 = vsel %vm956, %v954, %v964
    %v967 = vsel %vm957, %v955, %v965
    %v968 = vld [vmem:[%s12] sm:$0xff]
    %v969 = vld [vmem:[%s12 + $0x8] sm:$0xff]
    %v970 = vld [vmem:[%s12 + $0x10] sm:$0xff]
    %v971 = vld [vmem:[%s12 + $0x18] sm:$0xff]
    %v972 = vld [vmem:[%s12 + $0x20] sm:$0xff]
    %v973 = vld [vmem:[%s12 + $0x28] sm:$0xff]
    %v974 = vld [vmem:[%s12 + $0x30] sm:$0xff]
    %v975 = vld [vmem:[%s12 + $0x38] sm:$0xff]
    %v976 = vld [vmem:[%s12 + $0x40] sm:$0xff]
    %v977 = vld [vmem:[%s12 + $0x48] sm:$0xff]
    %v978 = vld [vmem:[%s12 + $0x50] sm:$0xff]
    %v979 = vld [vmem:[%s12 + $0x58] sm:$0xff]
    %v980 = vld [vmem:[%s12 + $0x60] sm:$0xff]
    %v981 = vld [vmem:[%s12 + $0x68] sm:$0xff]
    %v982 = vld [vmem:[%s12 + $0x70] sm:$0xff]
    %v983 = vld [vmem:[%s12 + $0x78] sm:$0xff]
    %v984 = vld [vmem:[#allocation11] sm:$0xf]
    %v985 = vld [vmem:[%s14] sm:$0xff]
    %v986 = vld [vmem:[%s14 + $0x8] sm:$0xff]
    %v987 = vld [vmem:[%s14 + $0x10] sm:$0xff]
    %v988 = vld [vmem:[%s14 + $0x18] sm:$0xff]
    %v989 = vld [vmem:[%s14 + $0x20] sm:$0xff]
    %v990 = vld [vmem:[%s14 + $0x28] sm:$0xff]
    %v991 = vld [vmem:[%s14 + $0x30] sm:$0xff]
    %v992 = vld [vmem:[%s14 + $0x38] sm:$0xff]
    %v993 = vld [vmem:[%s14 + $0x40] sm:$0xff]
    %v994 = vld [vmem:[%s14 + $0x48] sm:$0xff]
    %v995 = vld [vmem:[%s14 + $0x50] sm:$0xff]
    %v996 = vld [vmem:[%s14 + $0x58] sm:$0xff]
    %v997 = vld [vmem:[%s14 + $0x60] sm:$0xff]
    %v998 = vld [vmem:[%s14 + $0x68] sm:$0xff]
    %v999 = vld [vmem:[%s14 + $0x70] sm:$0xff]
    %v1000 = vld [vmem:[%s14 + $0x78] sm:$0xff]
    %v1001 = vld [vmem:[%s15] sm:$0x1]
    %v1002 = vld [vmem:[%s16] sm:$0xf]
    %1003 = vmatpush.msra.mxu0 %v983
    %1004 = vmatpush.msra.mxu0 %v982
    %1005 = vmatpush.msra.mxu0 %v981
    %1006 = vmatpush.msra.mxu0 %v980
    %1007 = vmatpush.msra.mxu0 %v979
    %1008 = vmatpush.msra.mxu0 %v978
    %1009 = vmatpush.msra.mxu0 %v977
    %1010 = vmatpush.msra.mxu0 %v976
    %1011 = vmatpush.msra.mxu0 %v975
    %1012 = vmatpush.msra.mxu0 %v974
    %1013 = vmatpush.msra.mxu0 %v973
    %1014 = vmatpush.msra.mxu0 %v972
    %1015 = vmatpush.msra.mxu0 %v971
    %1016 = vmatpush.msra.mxu0 %v970
    %1017 = vmatpush.msra.mxu0 %v969
    %1018 = vmatpush.msra.mxu0 %v968
    %1019 = vmatmul.f32.gmra.mxu0 %v966
    %v1020 = vpop.f32.mrf.mxu0
    %v1021 = vadd.f32 0.0, %v1020
    %1022 = vmatmul.f32.gmra.mxu0 %v967
    %v1023 = vpop.f32.mrf.mxu0
    %v1024 = vadd.f32 0.0, %v1023
    %1025 = vdwg.mxu0
    %1026 = vmatpush.msra.mxu0 %v1000
    %1027 = vmatpush.msra.mxu0 %v999
    %1028 = vmatpush.msra.mxu0 %v998
    %1029 = vmatpush.msra.mxu0 %v997
    %1030 = vmatpush.msra.mxu0 %v996
    %1031 = vmatpush.msra.mxu0 %v995
    %1032 = vmatpush.msra.mxu0 %v994
    %1033 = vmatpush.msra.mxu0 %v993
    %1034 = vmatpush.msra.mxu0 %v992
    %1035 = vmatpush.msra.mxu0 %v991
    %1036 = vmatpush.msra.mxu0 %v990
    %1037 = vmatpush.msra.mxu0 %v989
    %1038 = vmatpush.msra.mxu0 %v988
    %1039 = vmatpush.msra.mxu0 %v987
    %1040 = vmatpush.msra.mxu0 %v986
    %1041 = vmatpush.msra.mxu0 %v985
    %1042 = vmatmul.f32.gmra.mxu0 %v1021
    %v1043 = vpop.f32.mrf.mxu0
    %v1044 = vadd.f32 0.0, %v1043
    %1045 = vmatmul.f32.gmra.mxu0 %v1024
    %v1046 = vpop.f32.mrf.mxu0
    %v1047 = vadd.f32 0.0, %v1046
    %1048 = vdwg.mxu0
    %1049 = vmatpush.xpose.msra.mxu0 0.0
    %1050 = vmatpush.xpose.msra.mxu0 0.0
    %1051 = vmatpush.xpose.msra.mxu0 0.0
    %1052 = vmatpush.xpose.msra.mxu0 0.0
    %1053 = vmatpush.xpose.msra.mxu0 0.0
    %1054 = vmatpush.xpose.msra.mxu0 0.0
    %1055 = vmatpush.xpose.msra.mxu0 0.0
    %1056 = vmatpush.xpose.msra.mxu0 0.0
    %1057 = vmatpush.xpose.msra.mxu0 0.0
    %1058 = vmatpush.xpose.msra.mxu0 0.0
    %1059 = vmatpush.xpose.msra.mxu0 0.0
    %1060 = vmatpush.xpose.msra.mxu0 0.0
    %1061 = vmatpush.xpose.msra.mxu0 0.0
    %1062 = vmatpush.xpose.msra.mxu0 0.0
    %1063 = vmatpush.xpose.msra.mxu0 %v1024
    %1064 = vmatpush.xpose.msra.mxu0 %v1021
    %1065 = vmatmul.f32.gmra.mxu0 %v984
    %v1066 = vpop.f32.mrf.mxu0
    %v1067 = vadd.f32 0.0, %v1066
    %1068 = vdwg.mxu0
    %1070 = vset.pattern.permute.xlu0 0
    %1071 = vperm.xlu0 %1070, %v1044
    %v1072 = vpop.permute.xlu0 %1071
    %1075 = vset.pattern.permute.xlu0 0
    %1076 = vperm.xlu0 %1075, %v1047
    %v1077 = vpop.permute.xlu0 %1076
    %v1079 = vperm.slane %v1067, 0
    %v1080 = vadd.f32 %v1072, %v1079
    %v1081 = vadd.f32 %v1077, %v1079
    %v1082 = vmul.f32 %v1080, 0.2
    %v1083 = vmul.f32 %v1081, 0.2
    %v1084 = vmax.f32 %v1080, %v1082
    %v1085 = vmax.f32 %v1081, %v1083
    %v1086 = vadd.f32 %v1084, %v148
    %v1087 = vadd.f32 %v1085, %v149
    %v1088 = vsel %vm267, %v1086, -inf
    %1089 = vmax.xlane.f32.xlu0 %v1088
    %v1090 = vpop.xlane.xlu0 %1089
    %v1091 = vsel %vm267, %v1087, -inf
    %1092 = vmax.xlane.f32.xlu0 %v1091
    %v1093 = vpop.xlane.xlu0 %1092
    %v1094 = vsub.f32 %v1086, %v1090
    %v1095 = vsub.f32 %v1087, %v1093
    %v1096 = vmul.f32 %v1094, 1.442695
    %v1097 = vpow.pop %v1096
    %v1098 = vmul.f32 %v1095, 1.442695
    %v1099 = vpow.pop %v1098
    %v1100 = vsel %vm267, %v1097, 0.0
    %1101 = vadd.xlane.f32.xlu0 %v1100
    %v1102 = vpop.xlane.xlu0 %1101
    %v1103 = vsel %vm267, %v1099, 0.0
    %1104 = vadd.xlane.f32.xlu0 %v1103
    %v1105 = vpop.xlane.xlu0 %1104
    %v1106 = vrcp.pop %v1102
    %v1107 = vrcp.pop %v1105
    %v1108 = vmul.f32 %v1097, %v1106
    %v1109 = vmul.f32 %v1099, %v1107
    %v1111 = vsel %vm267, %v1108, 0
    %v1114 = vsel %vm267, %v1109, 0
    %1116 = vmatpush.msra.mxu0 0.0
    %1117 = vmatpush.msra.mxu0 0.0
    %1118 = vmatpush.msra.mxu0 0.0
    %1119 = vmatpush.msra.mxu0 0.0
    %1120 = vmatpush.msra.mxu0 0.0
    %1121 = vmatpush.msra.mxu0 0.0
    %1122 = vmatpush.msra.mxu0 0.0
    %1123 = vmatpush.msra.mxu0 0.0
    %1124 = vmatpush.msra.mxu0 0.0
    %1125 = vmatpush.msra.mxu0 0.0
    %1126 = vmatpush.msra.mxu0 0.0
    %1127 = vmatpush.msra.mxu0 0.0
    %1128 = vmatpush.msra.mxu0 0.0
    %1129 = vmatpush.msra.mxu0 0.0
    %1130 = vmatpush.msra.mxu0 %v1024
    %1131 = vmatpush.msra.mxu0 %v1021
    %1132 = vmatmul.f32.gmra.mxu0 %v1111
    %v1133 = vpop.f32.mrf.mxu0
    %v1134 = vadd.f32 0.0, %v1133
    %1135 = vmatmul.f32.gmra.mxu0 %v1114
    %v1136 = vpop.f32.mrf.mxu0
    %v1137 = vadd.f32 0.0, %v1136
    %1138 = vdwg.mxu0
    %v1139 = vperm.slane %v1002, 0
    %v1140 = vmul.f32 %v1134, %v1139
    %v1141 = vmul.f32 %v1137, %v1139
    %1142 = vset.pattern.permute.xlu0 1
    %1143 = vperm.xlu0 %1142, %v1044
    %v1144 = vpop.permute.xlu0 %1143
    %1146 = vset.pattern.permute.xlu0 1
    %1147 = vperm.xlu0 %1146, %v1047
    %v1148 = vpop.permute.xlu0 %1147
    %v1150 = vperm.slane %v1067, 1
    %v1151 = vadd.f32 %v1144, %v1150
    %v1152 = vadd.f32 %v1148, %v1150
    %v1153 = vmul.f32 %v1151, 0.2
    %v1154 = vmul.f32 %v1152, 0.2
    %v1155 = vmax.f32 %v1151, %v1153
    %v1156 = vmax.f32 %v1152, %v1154
    %v1157 = vadd.f32 %v1155, %v148
    %v1158 = vadd.f32 %v1156, %v149
    %v1159 = vsel %vm267, %v1157, -inf
    %1160 = vmax.xlane.f32.xlu0 %v1159
    %v1161 = vpop.xlane.xlu0 %1160
    %v1162 = vsel %vm267, %v1158, -inf
    %1163 = vmax.xlane.f32.xlu0 %v1162
    %v1164 = vpop.xlane.xlu0 %1163
    %v1165 = vsub.f32 %v1157, %v1161
    %v1166 = vsub.f32 %v1158, %v1164
    %v1167 = vmul.f32 %v1165, 1.442695
    %v1168 = vpow.pop %v1167
    %v1169 = vmul.f32 %v1166, 1.442695
    %v1170 = vpow.pop %v1169
    %v1171 = vsel %vm267, %v1168, 0.0
    %1172 = vadd.xlane.f32.xlu0 %v1171
    %v1173 = vpop.xlane.xlu0 %1172
    %v1174 = vsel %vm267, %v1170, 0.0
    %1175 = vadd.xlane.f32.xlu0 %v1174
    %v1176 = vpop.xlane.xlu0 %1175
    %v1177 = vrcp.pop %v1173
    %v1178 = vrcp.pop %v1176
    %v1179 = vmul.f32 %v1168, %v1177
    %v1180 = vmul.f32 %v1170, %v1178
    %v1182 = vsel %vm267, %v1179, 0
    %v1185 = vsel %vm267, %v1180, 0
    %1187 = vmatpush.msra.mxu0 0.0
    %1188 = vmatpush.msra.mxu0 0.0
    %1189 = vmatpush.msra.mxu0 0.0
    %1190 = vmatpush.msra.mxu0 0.0
    %1191 = vmatpush.msra.mxu0 0.0
    %1192 = vmatpush.msra.mxu0 0.0
    %1193 = vmatpush.msra.mxu0 0.0
    %1194 = vmatpush.msra.mxu0 0.0
    %1195 = vmatpush.msra.mxu0 0.0
    %1196 = vmatpush.msra.mxu0 0.0
    %1197 = vmatpush.msra.mxu0 0.0
    %1198 = vmatpush.msra.mxu0 0.0
    %1199 = vmatpush.msra.mxu0 0.0
    %1200 = vmatpush.msra.mxu0 0.0
    %1201 = vmatpush.msra.mxu0 %v1024
    %1202 = vmatpush.msra.mxu0 %v1021
    %1203 = vmatmul.f32.gmra.mxu0 %v1182
    %v1204 = vpop.f32.mrf.mxu0
    %v1205 = vadd.f32 0.0, %v1204
    %1206 = vmatmul.f32.gmra.mxu0 %v1185
    %v1207 = vpop.f32.mrf.mxu0
    %v1208 = vadd.f32 0.0, %v1207
    %1209 = vdwg.mxu0
    %v1210 = vperm.slane %v1002, 1
    %v1211 = vmul.f32 %v1205, %v1210
    %v1212 = vmul.f32 %v1208, %v1210
    %v1213 = vadd.f32 %v1140, %v1211
    %v1214 = vadd.f32 %v1141, %v1212
    %1215 = vset.pattern.permute.xlu0 2
    %1216 = vperm.xlu0 %1215, %v1044
    %v1217 = vpop.permute.xlu0 %1216
    %1219 = vset.pattern.permute.xlu0 2
    %1220 = vperm.xlu0 %1219, %v1047
    %v1221 = vpop.permute.xlu0 %1220
    %v1223 = vperm.slane %v1067, 2
    %v1224 = vadd.f32 %v1217, %v1223
    %v1225 = vadd.f32 %v1221, %v1223
    %v1226 = vmul.f32 %v1224, 0.2
    %v1227 = vmul.f32 %v1225, 0.2
    %v1228 = vmax.f32 %v1224, %v1226
    %v1229 = vmax.f32 %v1225, %v1227
    %v1230 = vadd.f32 %v1228, %v148
    %v1231 = vadd.f32 %v1229, %v149
    %v1232 = vsel %vm267, %v1230, -inf
    %1233 = vmax.xlane.f32.xlu0 %v1232
    %v1234 = vpop.xlane.xlu0 %1233
    %v1235 = vsel %vm267, %v1231, -inf
    %1236 = vmax.xlane.f32.xlu0 %v1235
    %v1237 = vpop.xlane.xlu0 %1236
    %v1238 = vsub.f32 %v1230, %v1234
    %v1239 = vsub.f32 %v1231, %v1237
    %v1240 = vmul.f32 %v1238, 1.442695
    %v1241 = vpow.pop %v1240
    %v1242 = vmul.f32 %v1239, 1.442695
    %v1243 = vpow.pop %v1242
    %v1244 = vsel %vm267, %v1241, 0.0
    %1245 = vadd.xlane.f32.xlu0 %v1244
    %v1246 = vpop.xlane.xlu0 %1245
    %v1247 = vsel %vm267, %v1243, 0.0
    %1248 = vadd.xlane.f32.xlu0 %v1247
    %v1249 = vpop.xlane.xlu0 %1248
    %v1250 = vrcp.pop %v1246
    %v1251 = vrcp.pop %v1249
    %v1252 = vmul.f32 %v1241, %v1250
    %v1253 = vmul.f32 %v1243, %v1251
    %v1255 = vsel %vm267, %v1252, 0
    %v1258 = vsel %vm267, %v1253, 0
    %1260 = vmatpush.msra.mxu0 0.0
    %1261 = vmatpush.msra.mxu0 0.0
    %1262 = vmatpush.msra.mxu0 0.0
    %1263 = vmatpush.msra.mxu0 0.0
    %1264 = vmatpush.msra.mxu0 0.0
    %1265 = vmatpush.msra.mxu0 0.0
    %1266 = vmatpush.msra.mxu0 0.0
    %1267 = vmatpush.msra.mxu0 0.0
    %1268 = vmatpush.msra.mxu0 0.0
    %1269 = vmatpush.msra.mxu0 0.0
    %1270 = vmatpush.msra.mxu0 0.0
    %1271 = vmatpush.msra.mxu0 0.0
    %1272 = vmatpush.msra.mxu0 0.0
    %1273 = vmatpush.msra.mxu0 0.0
    %1274 = vmatpush.msra.mxu0 %v1024
    %1275 = vmatpush.msra.mxu0 %v1021
    %1276 = vmatmul.f32.gmra.mxu0 %v1255
    %v1277 = vpop.f32.mrf.mxu0
    %v1278 = vadd.f32 0.0, %v1277
    %1279 = vmatmul.f32.gmra.mxu0 %v1258
    %v1280 = vpop.f32.mrf.mxu0
    %v1281 = vadd.f32 0.0, %v1280
    %1282 = vdwg.mxu0
    %v1283 = vperm.slane %v1002, 2
    %v1284 = vmul.f32 %v1278, %v1283
    %v1285 = vmul.f32 %v1281, %v1283
    %v1286 = vadd.f32 %v1213, %v1284
    %v1287 = vadd.f32 %v1214, %v1285
    %1288 = vset.pattern.permute.xlu0 3
    %1289 = vperm.xlu0 %1288, %v1044
    %v1290 = vpop.permute.xlu0 %1289
    %1292 = vset.pattern.permute.xlu0 3
    %1293 = vperm.xlu0 %1292, %v1047
    %v1294 = vpop.permute.xlu0 %1293
    %v1296 = vperm.slane %v1067, 3
    %v1297 = vadd.f32 %v1290, %v1296
    %v1298 = vadd.f32 %v1294, %v1296
    %v1299 = vmul.f32 %v1297, 0.2
    %v1300 = vmul.f32 %v1298, 0.2
    %v1301 = vmax.f32 %v1297, %v1299
    %v1302 = vmax.f32 %v1298, %v1300
    %v1303 = vadd.f32 %v1301, %v148
    %v1304 = vadd.f32 %v1302, %v149
    %v1305 = vsel %vm267, %v1303, -inf
    %1306 = vmax.xlane.f32.xlu0 %v1305
    %v1307 = vpop.xlane.xlu0 %1306
    %v1308 = vsel %vm267, %v1304, -inf
    %1309 = vmax.xlane.f32.xlu0 %v1308
    %v1310 = vpop.xlane.xlu0 %1309
    %v1311 = vsub.f32 %v1303, %v1307
    %v1312 = vsub.f32 %v1304, %v1310
    %v1313 = vmul.f32 %v1311, 1.442695
    %v1314 = vpow.pop %v1313
    %v1315 = vmul.f32 %v1312, 1.442695
    %v1316 = vpow.pop %v1315
    %v1317 = vsel %vm267, %v1314, 0.0
    %1318 = vadd.xlane.f32.xlu0 %v1317
    %v1319 = vpop.xlane.xlu0 %1318
    %v1320 = vsel %vm267, %v1316, 0.0
    %1321 = vadd.xlane.f32.xlu0 %v1320
    %v1322 = vpop.xlane.xlu0 %1321
    %v1323 = vrcp.pop %v1319
    %v1324 = vrcp.pop %v1322
    %v1325 = vmul.f32 %v1314, %v1323
    %v1326 = vmul.f32 %v1316, %v1324
    %v1328 = vsel %vm267, %v1325, 0
    %v1331 = vsel %vm267, %v1326, 0
    %1333 = vmatpush.msra.mxu0 0.0
    %1334 = vmatpush.msra.mxu0 0.0
    %1335 = vmatpush.msra.mxu0 0.0
    %1336 = vmatpush.msra.mxu0 0.0
    %1337 = vmatpush.msra.mxu0 0.0
    %1338 = vmatpush.msra.mxu0 0.0
    %1339 = vmatpush.msra.mxu0 0.0
    %1340 = vmatpush.msra.mxu0 0.0
    %1341 = vmatpush.msra.mxu0 0.0
    %1342 = vmatpush.msra.mxu0 0.0
    %1343 = vmatpush.msra.mxu0 0.0
    %1344 = vmatpush.msra.mxu0 0.0
    %1345 = vmatpush.msra.mxu0 0.0
    %1346 = vmatpush.msra.mxu0 0.0
    %1347 = vmatpush.msra.mxu0 %v1024
    %1348 = vmatpush.msra.mxu0 %v1021
    %1349 = vmatmul.f32.gmra.mxu0 %v1328
    %v1350 = vpop.f32.mrf.mxu0
    %v1351 = vadd.f32 0.0, %v1350
    %1352 = vmatmul.f32.gmra.mxu0 %v1331
    %v1353 = vpop.f32.mrf.mxu0
    %v1354 = vadd.f32 0.0, %v1353
    %1355 = vdwg.mxu0
    %v1356 = vperm.slane %v1002, 3
    %v1357 = vmul.f32 %v1351, %v1356
    %v1358 = vmul.f32 %v1354, %v1356
    %v1359 = vadd.f32 %v1286, %v1357
    %v1360 = vadd.f32 %v1287, %v1358
    %v1361 = vld [vmem:[%s17] sm:$0xff]
    %v1362 = vld [vmem:[%s17 + $0x8] sm:$0xff]
    %v1363 = vld [vmem:[%s17 + $0x10] sm:$0xff]
    %v1364 = vld [vmem:[%s17 + $0x18] sm:$0xff]
    %v1365 = vld [vmem:[%s17 + $0x20] sm:$0xff]
    %v1366 = vld [vmem:[%s17 + $0x28] sm:$0xff]
    %v1367 = vld [vmem:[%s17 + $0x30] sm:$0xff]
    %v1368 = vld [vmem:[%s17 + $0x38] sm:$0xff]
    %v1369 = vld [vmem:[%s17 + $0x40] sm:$0xff]
    %v1370 = vld [vmem:[%s17 + $0x48] sm:$0xff]
    %v1371 = vld [vmem:[%s17 + $0x50] sm:$0xff]
    %v1372 = vld [vmem:[%s17 + $0x58] sm:$0xff]
    %v1373 = vld [vmem:[%s17 + $0x60] sm:$0xff]
    %v1374 = vld [vmem:[%s17 + $0x68] sm:$0xff]
    %v1375 = vld [vmem:[%s17 + $0x70] sm:$0xff]
    %v1376 = vld [vmem:[%s17 + $0x78] sm:$0xff]
    %v1378 = vperm.slane %v1001, 0
    %1380 = vmatpush.msra.mxu0 %v1376
    %1381 = vmatpush.msra.mxu0 %v1375
    %1382 = vmatpush.msra.mxu0 %v1374
    %1383 = vmatpush.msra.mxu0 %v1373
    %1384 = vmatpush.msra.mxu0 %v1372
    %1385 = vmatpush.msra.mxu0 %v1371
    %1386 = vmatpush.msra.mxu0 %v1370
    %1387 = vmatpush.msra.mxu0 %v1369
    %1388 = vmatpush.msra.mxu0 %v1368
    %1389 = vmatpush.msra.mxu0 %v1367
    %1390 = vmatpush.msra.mxu0 %v1366
    %1391 = vmatpush.msra.mxu0 %v1365
    %1392 = vmatpush.msra.mxu0 %v1364
    %1393 = vmatpush.msra.mxu0 %v1363
    %1394 = vmatpush.msra.mxu0 %v1362
    %1395 = vmatpush.msra.mxu0 %v1361
    %1396 = vmatmul.f32.gmra.mxu0 %v1359
    %v1397 = vpop.f32.mrf.mxu0
    %v1398 = vadd.f32 %v1378, %v1397
    %1399 = vmatmul.f32.gmra.mxu0 %v1360
    %v1400 = vpop.f32.mrf.mxu0
    %v1401 = vadd.f32 %v1378, %v1400
    %1402 = vdwg.mxu0
    %1403 = vst [vmem:[#allocation13] sm:$0xff] %v1398
    %1404 = vst [vmem:[#allocation13 + $0x8] sm:$0xff] %v1401
    // Predicated region
    $region98: #{tpu_custom_call.1} parent=1 // pred_check
      _
    $region99: #{tpu_custom_call.1} parent=1 // pred_check_branch
      %1406 = sbr.rel (0) target = $region101
    $region100: #{tpu_custom_call.1} parent=1 // pred_region
      %1408 = vsyncadd [#allocation4], 0
      %s1409 = sshll.u32 [#allocation13], 4
      %s1410 = int_to_ptr.vmem [resolvable:$true] %s1409
      %s1411 = sshll.u32 %s18, 4
      %s1412 = int_to_ptr.hbm [resolvable:$true] %s1411
      %1417 = dma.vmem_to_hbm [thread:$0]  %s1410, 256, %s1412, [#allocation4], 128, 128, 8
    $region101: #{tpu_custom_call.1} parent=1 // pred_fallthru
      _
    // Predicated region
    $region102: #{tpu_custom_call.1} parent=1 // pred_check
      _
    $region103: #{tpu_custom_call.1} parent=1 // pred_check_branch
      %1419 = sbr.rel (0) target = $region105
    $region104: #{tpu_custom_call.1} parent=1 // pred_region
      %1421 = dma.done [#allocation4], 256
    $region105: #{tpu_custom_call.1} parent=1 // pred_fallthru
      _
    %1422 = vsyncpa [#allocation3], 1
    %1423 = vsyncpa [#allocation6], 1
    %1424 = vsyncpa [#allocation9], 1
    %1425 = vsyncpa [#allocation12], 1
    %1426 = vsyncpa [#allocation4], 1

</llo_original>
